<compile_context>
chip_gen: v5e
topology: v5e:2x2
jax: 0.10.0
libtpu: 0.0.40
codegen_flags: <defaults>
</compile_context>

<pallas_src>
import functools
import itertools

import jax
import jax.numpy as jnp
from jax.experimental import pallas as pl
from jax.experimental.pallas import tpu as pltpu


# ---- symmetry bookkeeping for the quadrupole / octupole terms -----------------
_PAIRS = ((0, 0), (1, 1), (2, 2), (0, 1), (0, 2), (1, 2))
_PAIR_IDX = {p: i for i, p in enumerate(_PAIRS)}
_TRIPLES = tuple(sorted({tuple(sorted((i, j, k)))
                         for i in range(3) for j in range(3) for k in range(3)}))

# Row layout of the fused per-atom coefficient block inside the data slab.
_C_T0 = 0        # 1  row : T0
_C_T1 = 1        # 3  rows: T1[x,y,z]
_C_T2S = 4       # 6  rows: symmetry-folded T2   (scalar quadrupole)
_C_T3S = 10      # 10 rows: symmetry-folded T3   (scalar octupole)
_C_T2F = 20      # 9  rows: full T2, row-major   (vector channel)
_C_T3V = 29      # 18 rows: per-i (j,k)-folded T3 (vector channel)
_NCOEF = 47

_LANE = 128      # atoms live on the lane axis -> tile quantum is 128


def _swish(x):
    return x * (1.0 / (1.0 + jnp.exp(-x)))


def multipole_kernel(data_ref, wcat_ref, wbig_ref, bcat_ref, out_ref):
    F = wcat_ref.shape[1]            # dipole_features
    A4 = wbig_ref.shape[0]           # 4 * n_atom_basis
    r_mu = F                         # mu rows start
    r_tc = 4 * F                     # coefficient rows start

    def coef(c):
        # One per-atom coefficient row, (1, tb); broadcasting against the (F, tb)
        # intermediates is a cheap sublane broadcast in this layout.
        return data_ref[pl.ds(r_tc + c, 1), :]

    # ---- packed weights / biases (aligned sublane slices) ---------------------
    wq0 = wcat_ref[pl.ds(0 * F, F), :]
    wq1 = wcat_ref[pl.ds(1 * F, F), :]
    wt_all = wcat_ref[pl.ds(2 * F, 3 * F), :]      # [wt1^T; wt2^T; wt3^T]
    ws0 = wcat_ref[pl.ds(5 * F, F), :]
    bq0 = bcat_ref[pl.ds(0 * F, F), :]
    bq1 = bcat_ref[pl.ds(1 * F, F), :]
    bs0 = bcat_ref[pl.ds(2 * F, F), :]
    bbig = bcat_ref[pl.ds(3 * F, A4), :]

    feat = data_ref[pl.ds(0, F), :]                # (F, tb)

    # denseq: Dense(F,F,swish) -> Dense(F,F)
    h = _swish(jnp.dot(wq0, feat, preferred_element_type=jnp.float32) + bq0)
    M0 = jnp.dot(wq1, h, preferred_element_type=jnp.float32) + bq1

    # Dipole linear maps: one fused (3F, F) weight, one dot per Cartesian
    # component (3 MXU dots instead of 9); order slices are 8-aligned.
    M1, M2, M3 = [], [], []
    for c in range(3):
        mu_c = data_ref[pl.ds(r_mu + c * F, F), :]
        m = jnp.dot(wt_all, mu_c, preferred_element_type=jnp.float32)   # (3F, tb)
        M1.append(m[0:F, :])
        M2.append(m[F:2 * F, :])
        M3.append(m[2 * F:3 * F, :])

    # Hoisted T1 rows (reused by the scalar and vector channels).
    t1 = [coef(_C_T1 + i) for i in range(3)]
    # Unique second-order products, shared by the scalar quadrupole term and the
    # vector-channel octupole term.
    P2 = [M2[a] * M2[b] for (a, b) in _PAIRS]

    # ---- scalar channel --------------------------------------------------------
    ms = coef(_C_T0) * M0
    for i in range(3):
        ms = ms + t1[i] * M1[i]
    for p in range(len(_PAIRS)):
        ms = ms + coef(_C_T2S + p) * P2[p]
    Q2 = [M3[a] * M3[b] for (a, b) in _PAIRS]              # M3 pair products
    for t, (a, b, c) in enumerate(_TRIPLES):
        ms = ms + coef(_C_T3S + t) * (Q2[_PAIR_IDX[(a, b)]] * M3[c])

    # ---- vector channel (one (F, tb) slab per Cartesian component) ------------
    v = []
    for i in range(3):
        vi = t1[i] * M0
        for j in range(3):
            vi = vi + coef(_C_T2F + 3 * i + j) * M1[j]
        for p in range(len(_PAIRS)):
            vi = vi + coef(_C_T3V + 6 * i + p) * P2[p]
        v.append(vi)

    # dense_s layer 0
    hs = _swish(jnp.dot(ws0, ms, preferred_element_type=jnp.float32) + bs0)

    # Fused final projection: sublane-concat [hs; v_x; v_y; v_z] -> (4F, tb) and
    # multiply by block-diag(ws1^T, wv^T, wv^T, wv^T); the (4A, tb) result
    # [ms | mv_x | mv_y | mv_z] is a single lane-dense store.
    X = jnp.concatenate([hs, v[0], v[1], v[2]], axis=0)
    out_ref[...] = (jnp.dot(wbig_ref[...], X, preferred_element_type=jnp.float32)
                    + bbig)


def _fold_coefficients(T0, T1, T2, T3):
    """Fuse all per-atom field coefficients into one (N, 47) slab."""
    N = T0.shape[0]
    cols = [T0.reshape(N, 1), T1]

    t2s = []
    for (a, b) in _PAIRS:                                  # scalar quadrupole
        t2s.append(T2[:, a, b] if a == b else T2[:, a, b] + T2[:, b, a])
    cols.append(jnp.stack(t2s, axis=-1))                   # (N, 6)

    t3s = []
    for tri in _TRIPLES:                                   # scalar octupole
        perms = set(itertools.permutations(tri))
        t3s.append(sum(T3[:, i, j, k] for (i, j, k) in perms))
    cols.append(jnp.stack(t3s, axis=-1))                   # (N, 10)

    cols.append(T2.reshape(N, 9))                          # vector channel, full T2

    t3v = []
    for i in range(3):                                     # vector-channel octupole
        for (a, b) in _PAIRS:
            t3v.append(T3[:, i, a, b] if a == b
                       else T3[:, i, a, b] + T3[:, i, b, a])
    cols.append(jnp.stack(t3v, axis=-1))                   # (N, 18)

    return jnp.concatenate(cols, axis=-1)                  # (N, 47)


def _round_up(x, m):
    return ((x + m - 1) // m) * m


def _cdiv(a, b):
    return (a + b - 1) // b


@functools.partial(jax.jit, static_argnames=("tb",))
def multipole_interaction_pallas(feat, mu, T0, T1, T2, T3, params, *, tb=1024):
    N, F = feat.shape
    A = params["ws1"].shape[1]

    # ---- atom tile: atoms are on the lane axis, so the quantum is 128 ----------
    tb_eff = max(_LANE, min(_round_up(tb, _LANE), _round_up(N, _LANE)))
    # v7x has 2 TensorCores: prefer >= 2 parallel grid steps when there is more
    # than one lane-tile of atoms (harmless on v5e/v6e).
    if N > _LANE and _round_up(N, tb_eff) // tb_eff < 2:
        tb_eff = _round_up(_cdiv(N, 2), _LANE)
    Np = _round_up(N, tb_eff)

    # ---- fused per-atom data slab, feature-major (atoms on lanes):
    # rows = [ feat^T (F) | mu_x^T (F) | mu_y^T (F) | mu_z^T (F) | coeff^T (47) | pad ]
    tcoef = _fold_coefficients(T0, T1, T2, T3)                          # (N, 47)
    data = jnp.concatenate(
        [feat.T, mu[:, :, 0].T, mu[:, :, 1].T, mu[:, :, 2].T, tcoef.T],
        axis=0).astype(jnp.float32)                                     # (4F+47, N)
    rows = data.shape[0]
    rows_p = _round_up(rows, 8)
    data = jnp.pad(data, ((0, rows_p - rows), (0, Np - N)))             # (rows_p, Np)

    # ---- packed weights (kernel computes W^T @ x on feature-major data) --------
    wcat = jnp.concatenate(
        [params["wq0"].T, params["wq1"].T, params["wt1"].T,
         params["wt2"].T, params["wt3"].T, params["ws0"].T],
        axis=0).astype(jnp.float32)                                     # (6F, F)
    wbig = jnp.zeros((4 * A, 4 * F), jnp.float32)
    wbig = wbig.at[0:A, 0:F].set(params["ws1"].T)
    for c in range(3):
        wbig = wbig.at[(1 + c) * A:(2 + c) * A,
                       (1 + c) * F:(2 + c) * F].set(params["wv"].T)
    bbig = jnp.zeros((4 * A, 1), jnp.float32).at[0:A, :].set(params["bs1"].T)
    bcat = jnp.concatenate(
        [params["bq0"].T, params["bq1"].T, params["bs0"].T, bbig],
        axis=0).astype(jnp.float32)                                     # (3F+4A, 1)

    out = pl.pallas_call(
        multipole_kernel,
        out_shape=jax.ShapeDtypeStruct((4 * A, Np), jnp.float32),
        grid=(Np // tb_eff,),
        in_specs=[
            pl.BlockSpec((rows_p, tb_eff), lambda i: (0, i)),
            pl.BlockSpec(wcat.shape, lambda i: (0, 0)),
            pl.BlockSpec(wbig.shape, lambda i: (0, 0)),
            pl.BlockSpec(bcat.shape, lambda i: (0, 0)),
        ],
        out_specs=pl.BlockSpec((4 * A, tb_eff), lambda i: (0, i)),
        compiler_params=pltpu.CompilerParams(dimension_semantics=("parallel",)),
    )(data, wcat, wbig, bcat)

    out = out[:, :N]                                                    # drop lane pad
    ms = out[0:A, :].T                                                  # (N, A)
    mv = jnp.stack([out[A:2 * A, :].T,
                    out[2 * A:3 * A, :].T,
                    out[3 * A:4 * A, :].T], axis=-1)                    # (N, A, 3)
    return ms, mv


def reference(feat, mu, T0, T1, T2, T3, p):
    """Pure-JAX mirror of the PyTorch forward (weights already transposed to (in,out))."""
    swish = lambda x: x * jax.nn.sigmoid(x)
    M0 = swish(feat @ p["wq0"] + p["bq0"]) @ p["wq1"] + p["bq1"]
    M1 = jnp.einsum("nfc,fg->ngc", mu, p["wt1"])
    M2 = jnp.einsum("nfc,fg->ngc", mu, p["wt2"])
    M3 = jnp.einsum("nfc,fg->ngc", mu, p["wt3"])
    ms = jnp.sum(M1 * T1[:, None, :], axis=-1)
    ms = ms + T0[:, None] * M0
    mv = T1[:, None, :] * M0[..., None]                               # (N,F,3)
    quad = M2[..., None] * M2[:, :, None, :]                          # (N,F,3,3)
    ms = ms + jnp.sum(quad * T2[:, None], axis=(-1, -2))
    mv = mv + jnp.einsum("nij,nfj->nfi", T2, M1)
    octu = M3[:, :, :, None, None] * M3[:, :, None, :, None] * M3[:, :, None, None, :]
    ms = ms + jnp.sum(octu * T3[:, None], axis=(-1, -2, -3))
    mv = mv + jnp.sum(T3[:, None] * quad[:, :, None], axis=(-1, -2))
    mv = jnp.einsum("nfc,fa->nac", mv, p["wv"])                       # (N,A,3)
    ms = swish(ms @ p["ws0"] + p["bs0"]) @ p["ws1"] + p["bs1"]
    return ms, mv


if __name__ == "__main__":
    # atoms (deliberately NOT a multiple of the lane tile), dipole_features, n_atom_basis
    N, F, A = 67, 32, 16

    key = jax.random.PRNGKey(0)
    keys = jax.random.split(key, 20)

    feat = jax.random.normal(keys[0], (N, F), jnp.float32)
    mu = jax.random.normal(keys[1], (N, F, 3), jnp.float32)
    T0 = jax.random.normal(keys[2], (N,), jnp.float32)
    T1 = jax.random.normal(keys[3], (N, 3), jnp.float32)
    T2 = jax.random.normal(keys[4], (N, 3, 3), jnp.float32)
    T3 = jax.random.normal(keys[5], (N, 3, 3, 3), jnp.float32)

    # Deterministic synthetic parameters. PyTorch Linear stores W as (out, in);
    # generate that shape then transpose so the reference computes x @ W^T + b.
    def lin(k, out_f, in_f):
        return (0.1 * jax.random.normal(k, (out_f, in_f), jnp.float32)).T

    def bias(k, out_f):
        return 0.05 * jax.random.normal(k, (1, out_f), jnp.float32)

    params = {
        "wq0": lin(keys[6], F, F), "bq0": bias(keys[7], F),
        "wq1": lin(keys[8], F, F), "bq1": bias(keys[9], F),
        "wt1": lin(keys[10], F, F),
        "wt2": lin(keys[11], F, F),
        "wt3": lin(keys[12], F, F),
        "ws0": lin(keys[13], F, F), "bs0": bias(keys[14], F),
        "ws1": lin(keys[15], A, F), "bs1": bias(keys[16], A),
        "wv": lin(keys[17], A, F),
    }

    ms, mv = multipole_interaction_pallas(feat, mu, T0, T1, T2, T3, params)
    jax.block_until_ready((ms, mv))

    ms_ref, mv_ref = reference(feat, mu, T0, T1, T2, T3, params)
    assert ms.shape == (N, A) and mv.shape == (N, A, 3)
    assert jnp.allclose(ms, ms_ref, atol=1e-4, rtol=1e-4)
    assert jnp.allclose(mv, mv_ref, atol=1e-4, rtol=1e-4)
    print("KERNEL_OK")
</pallas_src>

<mosaic_0001>
module attributes {stable_mosaic.version = 11 : i64} {
  func.func @multipole_kernel(%arg0: i32, %arg1: memref<176x128xf32, #tpu.memory_space<vmem>>, %arg2: memref<192x32xf32, #tpu.memory_space<vmem>>, %arg3: memref<64x128xf32, #tpu.memory_space<vmem>>, %arg4: memref<160x1xf32, #tpu.memory_space<vmem>>, %arg5: memref<64x128xf32, #tpu.memory_space<vmem>>) attributes {dimension_semantics = [#tpu.dimension_semantics<parallel>], iteration_bounds = array<i64: 1>, scalar_prefetch = 0 : i64, scratch_operands = 0 : i64, tpu.core_type = #tpu.core_type<tc>, window_params = [{transform_indices = @transform_0, window_bounds = array<i64: 176, 128>}, {pipeline_mode = #tpu.pipeline_mode<synchronous>, transform_indices = @transform_1, window_bounds = array<i64: 192, 32>}, {pipeline_mode = #tpu.pipeline_mode<synchronous>, transform_indices = @transform_2, window_bounds = array<i64: 64, 128>}, {pipeline_mode = #tpu.pipeline_mode<synchronous>, transform_indices = @transform_3, window_bounds = array<i64: 160, 1>}, {transform_indices = @transform_4, window_bounds = array<i64: 64, 128>}]} {
    %c0 = arith.constant 0 : index
    %c0_0 = arith.constant 0 : index
    %0 = vector.load %arg2[%c0, %c0_0] : memref<192x32xf32, #tpu.memory_space<vmem>>, vector<32x32xf32>
    %c32 = arith.constant 32 : index
    %c0_1 = arith.constant 0 : index
    %1 = vector.load %arg2[%c32, %c0_1] : memref<192x32xf32, #tpu.memory_space<vmem>>, vector<32x32xf32>
    %c64 = arith.constant 64 : index
    %c0_2 = arith.constant 0 : index
    %2 = vector.load %arg2[%c64, %c0_2] : memref<192x32xf32, #tpu.memory_space<vmem>>, vector<96x32xf32>
    %c160 = arith.constant 160 : index
    %c0_3 = arith.constant 0 : index
    %3 = vector.load %arg2[%c160, %c0_3] : memref<192x32xf32, #tpu.memory_space<vmem>>, vector<32x32xf32>
    %c0_4 = arith.constant 0 : index
    %c0_5 = arith.constant 0 : index
    %4 = vector.load %arg4[%c0_4, %c0_5] : memref<160x1xf32, #tpu.memory_space<vmem>>, vector<32x1xf32>
    %c32_6 = arith.constant 32 : index
    %c0_7 = arith.constant 0 : index
    %5 = vector.load %arg4[%c32_6, %c0_7] : memref<160x1xf32, #tpu.memory_space<vmem>>, vector<32x1xf32>
    %c64_8 = arith.constant 64 : index
    %c0_9 = arith.constant 0 : index
    %6 = vector.load %arg4[%c64_8, %c0_9] : memref<160x1xf32, #tpu.memory_space<vmem>>, vector<32x1xf32>
    %c96 = arith.constant 96 : index
    %c0_10 = arith.constant 0 : index
    %7 = vector.load %arg4[%c96, %c0_10] : memref<160x1xf32, #tpu.memory_space<vmem>>, vector<64x1xf32>
    %c0_11 = arith.constant 0 : index
    %c0_12 = arith.constant 0 : index
    %8 = vector.load %arg1[%c0_11, %c0_12] : memref<176x128xf32, #tpu.memory_space<vmem>>, vector<32x128xf32>
    %cst = arith.constant dense<0.000000e+00> : vector<32x128xf32>
    %9 = tpu.matmul %0, %8, %cst {dimension_numbers = #tpu.dot_dimension_numbers<[1], [0], [0], [1], [0, 0, 1, 1], [], []>} : vector<32x32xf32>, vector<32x128xf32>, vector<32x128xf32> -> vector<32x128xf32>
    %10 = vector.broadcast %4 : vector<32x1xf32> to vector<32x128xf32>
    %11 = arith.addf %9, %10 : vector<32x128xf32>
    %cst_13 = arith.constant 0.000000e+00 : f32
    %12 = vector.broadcast %cst_13 : f32 to vector<32x128xf32>
    %13 = arith.subf %12, %11 : vector<32x128xf32>
    %14 = math.exp %13 : vector<32x128xf32>
    %cst_14 = arith.constant 1.000000e+00 : f32
    %15 = vector.broadcast %cst_14 : f32 to vector<32x128xf32>
    %16 = arith.addf %15, %14 : vector<32x128xf32>
    %cst_15 = arith.constant 1.000000e+00 : f32
    %17 = vector.broadcast %cst_15 : f32 to vector<32x128xf32>
    %18 = arith.divf %17, %16 : vector<32x128xf32>
    %19 = arith.mulf %11, %18 : vector<32x128xf32>
    %cst_16 = arith.constant dense<0.000000e+00> : vector<32x128xf32>
    %20 = tpu.matmul %1, %19, %cst_16 {dimension_numbers = #tpu.dot_dimension_numbers<[1], [0], [0], [1], [0, 0, 1, 1], [], []>} : vector<32x32xf32>, vector<32x128xf32>, vector<32x128xf32> -> vector<32x128xf32>
    %21 = vector.broadcast %5 : vector<32x1xf32> to vector<32x128xf32>
    %22 = arith.addf %20, %21 : vector<32x128xf32>
    %c32_17 = arith.constant 32 : index
    %c0_18 = arith.constant 0 : index
    %23 = vector.load %arg1[%c32_17, %c0_18] : memref<176x128xf32, #tpu.memory_space<vmem>>, vector<32x128xf32>
    %cst_19 = arith.constant dense<0.000000e+00> : vector<96x128xf32>
    %24 = tpu.matmul %2, %23, %cst_19 {dimension_numbers = #tpu.dot_dimension_numbers<[1], [0], [0], [1], [0, 0, 1, 1], [], []>} : vector<96x32xf32>, vector<32x128xf32>, vector<96x128xf32> -> vector<96x128xf32>
    %25 = vector.extract_strided_slice %24 {offsets = [0, 0], sizes = [32, 128], strides = [1, 1]} : vector<96x128xf32> to vector<32x128xf32>
    %26 = vector.extract_strided_slice %24 {offsets = [32, 0], sizes = [32, 128], strides = [1, 1]} : vector<96x128xf32> to vector<32x128xf32>
    %27 = vector.extract_strided_slice %24 {offsets = [64, 0], sizes = [32, 128], strides = [1, 1]} : vector<96x128xf32> to vector<32x128xf32>
    %c64_20 = arith.constant 64 : index
    %c0_21 = arith.constant 0 : index
    %28 = vector.load %arg1[%c64_20, %c0_21] : memref<176x128xf32, #tpu.memory_space<vmem>>, vector<32x128xf32>
    %cst_22 = arith.constant dense<0.000000e+00> : vector<96x128xf32>
    %29 = tpu.matmul %2, %28, %cst_22 {dimension_numbers = #tpu.dot_dimension_numbers<[1], [0], [0], [1], [0, 0, 1, 1], [], []>} : vector<96x32xf32>, vector<32x128xf32>, vector<96x128xf32> -> vector<96x128xf32>
    %30 = vector.extract_strided_slice %29 {offsets = [0, 0], sizes = [32, 128], strides = [1, 1]} : vector<96x128xf32> to vector<32x128xf32>
    %31 = vector.extract_strided_slice %29 {offsets = [32, 0], sizes = [32, 128], strides = [1, 1]} : vector<96x128xf32> to vector<32x128xf32>
    %32 = vector.extract_strided_slice %29 {offsets = [64, 0], sizes = [32, 128], strides = [1, 1]} : vector<96x128xf32> to vector<32x128xf32>
    %c96_23 = arith.constant 96 : index
    %c0_24 = arith.constant 0 : index
    %33 = vector.load %arg1[%c96_23, %c0_24] : memref<176x128xf32, #tpu.memory_space<vmem>>, vector<32x128xf32>
    %cst_25 = arith.constant dense<0.000000e+00> : vector<96x128xf32>
    %34 = tpu.matmul %2, %33, %cst_25 {dimension_numbers = #tpu.dot_dimension_numbers<[1], [0], [0], [1], [0, 0, 1, 1], [], []>} : vector<96x32xf32>, vector<32x128xf32>, vector<96x128xf32> -> vector<96x128xf32>
    %35 = vector.extract_strided_slice %34 {offsets = [0, 0], sizes = [32, 128], strides = [1, 1]} : vector<96x128xf32> to vector<32x128xf32>
    %36 = vector.extract_strided_slice %34 {offsets = [32, 0], sizes = [32, 128], strides = [1, 1]} : vector<96x128xf32> to vector<32x128xf32>
    %37 = vector.extract_strided_slice %34 {offsets = [64, 0], sizes = [32, 128], strides = [1, 1]} : vector<96x128xf32> to vector<32x128xf32>
    %c129 = arith.constant 129 : index
    %c0_26 = arith.constant 0 : index
    %38 = vector.load %arg1[%c129, %c0_26] : memref<176x128xf32, #tpu.memory_space<vmem>>, vector<1x128xf32>
    %c130 = arith.constant 130 : index
    %c0_27 = arith.constant 0 : index
    %39 = vector.load %arg1[%c130, %c0_27] : memref<176x128xf32, #tpu.memory_space<vmem>>, vector<1x128xf32>
    %c131 = arith.constant 131 : index
    %c0_28 = arith.constant 0 : index
    %40 = vector.load %arg1[%c131, %c0_28] : memref<176x128xf32, #tpu.memory_space<vmem>>, vector<1x128xf32>
    %41 = arith.mulf %26, %26 : vector<32x128xf32>
    %42 = arith.mulf %31, %31 : vector<32x128xf32>
    %43 = arith.mulf %36, %36 : vector<32x128xf32>
    %44 = arith.mulf %26, %31 : vector<32x128xf32>
    %45 = arith.mulf %26, %36 : vector<32x128xf32>
    %46 = arith.mulf %31, %36 : vector<32x128xf32>
    %c128 = arith.constant 128 : index
    %c0_29 = arith.constant 0 : index
    %47 = vector.load %arg1[%c128, %c0_29] : memref<176x128xf32, #tpu.memory_space<vmem>>, vector<1x128xf32>
    %48 = vector.broadcast %47 : vector<1x128xf32> to vector<32x128xf32>
    %49 = arith.mulf %48, %22 : vector<32x128xf32>
    %50 = vector.broadcast %38 : vector<1x128xf32> to vector<32x128xf32>
    %51 = arith.mulf %50, %25 : vector<32x128xf32>
    %52 = arith.addf %49, %51 : vector<32x128xf32>
    %53 = vector.broadcast %39 : vector<1x128xf32> to vector<32x128xf32>
    %54 = arith.mulf %53, %30 : vector<32x128xf32>
    %55 = arith.addf %52, %54 : vector<32x128xf32>
    %56 = vector.broadcast %40 : vector<1x128xf32> to vector<32x128xf32>
    %57 = arith.mulf %56, %35 : vector<32x128xf32>
    %58 = arith.addf %55, %57 : vector<32x128xf32>
    %c132 = arith.constant 132 : index
    %c0_30 = arith.constant 0 : index
    %59 = vector.load %arg1[%c132, %c0_30] : memref<176x128xf32, #tpu.memory_space<vmem>>, vector<1x128xf32>
    %60 = vector.broadcast %59 : vector<1x128xf32> to vector<32x128xf32>
    %61 = arith.mulf %60, %41 : vector<32x128xf32>
    %62 = arith.addf %58, %61 : vector<32x128xf32>
    %c133 = arith.constant 133 : index
    %c0_31 = arith.constant 0 : index
    %63 = vector.load %arg1[%c133, %c0_31] : memref<176x128xf32, #tpu.memory_space<vmem>>, vector<1x128xf32>
    %64 = vector.broadcast %63 : vector<1x128xf32> to vector<32x128xf32>
    %65 = arith.mulf %64, %42 : vector<32x128xf32>
    %66 = arith.addf %62, %65 : vector<32x128xf32>
    %c134 = arith.constant 134 : index
    %c0_32 = arith.constant 0 : index
    %67 = vector.load %arg1[%c134, %c0_32] : memref<176x128xf32, #tpu.memory_space<vmem>>, vector<1x128xf32>
    %68 = vector.broadcast %67 : vector<1x128xf32> to vector<32x128xf32>
    %69 = arith.mulf %68, %43 : vector<32x128xf32>
    %70 = arith.addf %66, %69 : vector<32x128xf32>
    %c135 = arith.constant 135 : index
    %c0_33 = arith.constant 0 : index
    %71 = vector.load %arg1[%c135, %c0_33] : memref<176x128xf32, #tpu.memory_space<vmem>>, vector<1x128xf32>
    %72 = vector.broadcast %71 : vector<1x128xf32> to vector<32x128xf32>
    %73 = arith.mulf %72, %44 : vector<32x128xf32>
    %74 = arith.addf %70, %73 : vector<32x128xf32>
    %c136 = arith.constant 136 : index
    %c0_34 = arith.constant 0 : index
    %75 = vector.load %arg1[%c136, %c0_34] : memref<176x128xf32, #tpu.memory_space<vmem>>, vector<1x128xf32>
    %76 = vector.broadcast %75 : vector<1x128xf32> to vector<32x128xf32>
    %77 = arith.mulf %76, %45 : vector<32x128xf32>
    %78 = arith.addf %74, %77 : vector<32x128xf32>
    %c137 = arith.constant 137 : index
    %c0_35 = arith.constant 0 : index
    %79 = vector.load %arg1[%c137, %c0_35] : memref<176x128xf32, #tpu.memory_space<vmem>>, vector<1x128xf32>
    %80 = vector.broadcast %79 : vector<1x128xf32> to vector<32x128xf32>
    %81 = arith.mulf %80, %46 : vector<32x128xf32>
    %82 = arith.addf %78, %81 : vector<32x128xf32>
    %83 = arith.mulf %27, %27 : vector<32x128xf32>
    %84 = arith.mulf %32, %32 : vector<32x128xf32>
    %85 = arith.mulf %37, %37 : vector<32x128xf32>
    %86 = arith.mulf %27, %32 : vector<32x128xf32>
    %87 = arith.mulf %27, %37 : vector<32x128xf32>
    %88 = arith.mulf %32, %37 : vector<32x128xf32>
    %c138 = arith.constant 138 : index
    %c0_36 = arith.constant 0 : index
    %89 = vector.load %arg1[%c138, %c0_36] : memref<176x128xf32, #tpu.memory_space<vmem>>, vector<1x128xf32>
    %90 = arith.mulf %83, %27 : vector<32x128xf32>
    %91 = vector.broadcast %89 : vector<1x128xf32> to vector<32x128xf32>
    %92 = arith.mulf %91, %90 : vector<32x128xf32>
    %93 = arith.addf %82, %92 : vector<32x128xf32>
    %c139 = arith.constant 139 : index
    %c0_37 = arith.constant 0 : index
    %94 = vector.load %arg1[%c139, %c0_37] : memref<176x128xf32, #tpu.memory_space<vmem>>, vector<1x128xf32>
    %95 = arith.mulf %83, %32 : vector<32x128xf32>
    %96 = vector.broadcast %94 : vector<1x128xf32> to vector<32x128xf32>
    %97 = arith.mulf %96, %95 : vector<32x128xf32>
    %98 = arith.addf %93, %97 : vector<32x128xf32>
    %c140 = arith.constant 140 : index
    %c0_38 = arith.constant 0 : index
    %99 = vector.load %arg1[%c140, %c0_38] : memref<176x128xf32, #tpu.memory_space<vmem>>, vector<1x128xf32>
    %100 = arith.mulf %83, %37 : vector<32x128xf32>
    %101 = vector.broadcast %99 : vector<1x128xf32> to vector<32x128xf32>
    %102 = arith.mulf %101, %100 : vector<32x128xf32>
    %103 = arith.addf %98, %102 : vector<32x128xf32>
    %c141 = arith.constant 141 : index
    %c0_39 = arith.constant 0 : index
    %104 = vector.load %arg1[%c141, %c0_39] : memref<176x128xf32, #tpu.memory_space<vmem>>, vector<1x128xf32>
    %105 = arith.mulf %86, %32 : vector<32x128xf32>
    %106 = vector.broadcast %104 : vector<1x128xf32> to vector<32x128xf32>
    %107 = arith.mulf %106, %105 : vector<32x128xf32>
    %108 = arith.addf %103, %107 : vector<32x128xf32>
    %c142 = arith.constant 142 : index
    %c0_40 = arith.constant 0 : index
    %109 = vector.load %arg1[%c142, %c0_40] : memref<176x128xf32, #tpu.memory_space<vmem>>, vector<1x128xf32>
    %110 = arith.mulf %86, %37 : vector<32x128xf32>
    %111 = vector.broadcast %109 : vector<1x128xf32> to vector<32x128xf32>
    %112 = arith.mulf %111, %110 : vector<32x128xf32>
    %113 = arith.addf %108, %112 : vector<32x128xf32>
    %c143 = arith.constant 143 : index
    %c0_41 = arith.constant 0 : index
    %114 = vector.load %arg1[%c143, %c0_41] : memref<176x128xf32, #tpu.memory_space<vmem>>, vector<1x128xf32>
    %115 = arith.mulf %87, %37 : vector<32x128xf32>
    %116 = vector.broadcast %114 : vector<1x128xf32> to vector<32x128xf32>
    %117 = arith.mulf %116, %115 : vector<32x128xf32>
    %118 = arith.addf %113, %117 : vector<32x128xf32>
    %c144 = arith.constant 144 : index
    %c0_42 = arith.constant 0 : index
    %119 = vector.load %arg1[%c144, %c0_42] : memref<176x128xf32, #tpu.memory_space<vmem>>, vector<1x128xf32>
    %120 = arith.mulf %84, %32 : vector<32x128xf32>
    %121 = vector.broadcast %119 : vector<1x128xf32> to vector<32x128xf32>
    %122 = arith.mulf %121, %120 : vector<32x128xf32>
    %123 = arith.addf %118, %122 : vector<32x128xf32>
    %c145 = arith.constant 145 : index
    %c0_43 = arith.constant 0 : index
    %124 = vector.load %arg1[%c145, %c0_43] : memref<176x128xf32, #tpu.memory_space<vmem>>, vector<1x128xf32>
    %125 = arith.mulf %84, %37 : vector<32x128xf32>
    %126 = vector.broadcast %124 : vector<1x128xf32> to vector<32x128xf32>
    %127 = arith.mulf %126, %125 : vector<32x128xf32>
    %128 = arith.addf %123, %127 : vector<32x128xf32>
    %c146 = arith.constant 146 : index
    %c0_44 = arith.constant 0 : index
    %129 = vector.load %arg1[%c146, %c0_44] : memref<176x128xf32, #tpu.memory_space<vmem>>, vector<1x128xf32>
    %130 = arith.mulf %88, %37 : vector<32x128xf32>
    %131 = vector.broadcast %129 : vector<1x128xf32> to vector<32x128xf32>
    %132 = arith.mulf %131, %130 : vector<32x128xf32>
    %133 = arith.addf %128, %132 : vector<32x128xf32>
    %c147 = arith.constant 147 : index
    %c0_45 = arith.constant 0 : index
    %134 = vector.load %arg1[%c147, %c0_45] : memref<176x128xf32, #tpu.memory_space<vmem>>, vector<1x128xf32>
    %135 = arith.mulf %85, %37 : vector<32x128xf32>
    %136 = vector.broadcast %134 : vector<1x128xf32> to vector<32x128xf32>
    %137 = arith.mulf %136, %135 : vector<32x128xf32>
    %138 = arith.addf %133, %137 : vector<32x128xf32>
    %139 = vector.broadcast %38 : vector<1x128xf32> to vector<32x128xf32>
    %140 = arith.mulf %139, %22 : vector<32x128xf32>
    %c148 = arith.constant 148 : index
    %c0_46 = arith.constant 0 : index
    %141 = vector.load %arg1[%c148, %c0_46] : memref<176x128xf32, #tpu.memory_space<vmem>>, vector<1x128xf32>
    %142 = vector.broadcast %141 : vector<1x128xf32> to vector<32x128xf32>
    %143 = arith.mulf %142, %25 : vector<32x128xf32>
    %144 = arith.addf %140, %143 : vector<32x128xf32>
    %c149 = arith.constant 149 : index
    %c0_47 = arith.constant 0 : index
    %145 = vector.load %arg1[%c149, %c0_47] : memref<176x128xf32, #tpu.memory_space<vmem>>, vector<1x128xf32>
    %146 = vector.broadcast %145 : vector<1x128xf32> to vector<32x128xf32>
    %147 = arith.mulf %146, %30 : vector<32x128xf32>
    %148 = arith.addf %144, %147 : vector<32x128xf32>
    %c150 = arith.constant 150 : index
    %c0_48 = arith.constant 0 : index
    %149 = vector.load %arg1[%c150, %c0_48] : memref<176x128xf32, #tpu.memory_space<vmem>>, vector<1x128xf32>
    %150 = vector.broadcast %149 : vector<1x128xf32> to vector<32x128xf32>
    %151 = arith.mulf %150, %35 : vector<32x128xf32>
    %152 = arith.addf %148, %151 : vector<32x128xf32>
    %c157 = arith.constant 157 : index
    %c0_49 = arith.constant 0 : index
    %153 = vector.load %arg1[%c157, %c0_49] : memref<176x128xf32, #tpu.memory_space<vmem>>, vector<1x128xf32>
    %154 = vector.broadcast %153 : vector<1x128xf32> to vector<32x128xf32>
    %155 = arith.mulf %154, %41 : vector<32x128xf32>
    %156 = arith.addf %152, %155 : vector<32x128xf32>
    %c158 = arith.constant 158 : index
    %c0_50 = arith.constant 0 : index
    %157 = vector.load %arg1[%c158, %c0_50] : memref<176x128xf32, #tpu.memory_space<vmem>>, vector<1x128xf32>
    %158 = vector.broadcast %157 : vector<1x128xf32> to vector<32x128xf32>
    %159 = arith.mulf %158, %42 : vector<32x128xf32>
    %160 = arith.addf %156, %159 : vector<32x128xf32>
    %c159 = arith.constant 159 : index
    %c0_51 = arith.constant 0 : index
    %161 = vector.load %arg1[%c159, %c0_51] : memref<176x128xf32, #tpu.memory_space<vmem>>, vector<1x128xf32>
    %162 = vector.broadcast %161 : vector<1x128xf32> to vector<32x128xf32>
    %163 = arith.mulf %162, %43 : vector<32x128xf32>
    %164 = arith.addf %160, %163 : vector<32x128xf32>
    %c160_52 = arith.constant 160 : index
    %c0_53 = arith.constant 0 : index
    %165 = vector.load %arg1[%c160_52, %c0_53] : memref<176x128xf32, #tpu.memory_space<vmem>>, vector<1x128xf32>
    %166 = vector.broadcast %165 : vector<1x128xf32> to vector<32x128xf32>
    %167 = arith.mulf %166, %44 : vector<32x128xf32>
    %168 = arith.addf %164, %167 : vector<32x128xf32>
    %c161 = arith.constant 161 : index
    %c0_54 = arith.constant 0 : index
    %169 = vector.load %arg1[%c161, %c0_54] : memref<176x128xf32, #tpu.memory_space<vmem>>, vector<1x128xf32>
    %170 = vector.broadcast %169 : vector<1x128xf32> to vector<32x128xf32>
    %171 = arith.mulf %170, %45 : vector<32x128xf32>
    %172 = arith.addf %168, %171 : vector<32x128xf32>
    %c162 = arith.constant 162 : index
    %c0_55 = arith.constant 0 : index
    %173 = vector.load %arg1[%c162, %c0_55] : memref<176x128xf32, #tpu.memory_space<vmem>>, vector<1x128xf32>
    %174 = vector.broadcast %173 : vector<1x128xf32> to vector<32x128xf32>
    %175 = arith.mulf %174, %46 : vector<32x128xf32>
    %176 = arith.addf %172, %175 : vector<32x128xf32>
    %177 = vector.broadcast %39 : vector<1x128xf32> to vector<32x128xf32>
    %178 = arith.mulf %177, %22 : vector<32x128xf32>
    %c151 = arith.constant 151 : index
    %c0_56 = arith.constant 0 : index
    %179 = vector.load %arg1[%c151, %c0_56] : memref<176x128xf32, #tpu.memory_space<vmem>>, vector<1x128xf32>
    %180 = vector.broadcast %179 : vector<1x128xf32> to vector<32x128xf32>
    %181 = arith.mulf %180, %25 : vector<32x128xf32>
    %182 = arith.addf %178, %181 : vector<32x128xf32>
    %c152 = arith.constant 152 : index
    %c0_57 = arith.constant 0 : index
    %183 = vector.load %arg1[%c152, %c0_57] : memref<176x128xf32, #tpu.memory_space<vmem>>, vector<1x128xf32>
    %184 = vector.broadcast %183 : vector<1x128xf32> to vector<32x128xf32>
    %185 = arith.mulf %184, %30 : vector<32x128xf32>
    %186 = arith.addf %182, %185 : vector<32x128xf32>
    %c153 = arith.constant 153 : index
    %c0_58 = arith.constant 0 : index
    %187 = vector.load %arg1[%c153, %c0_58] : memref<176x128xf32, #tpu.memory_space<vmem>>, vector<1x128xf32>
    %188 = vector.broadcast %187 : vector<1x128xf32> to vector<32x128xf32>
    %189 = arith.mulf %188, %35 : vector<32x128xf32>
    %190 = arith.addf %186, %189 : vector<32x128xf32>
    %c163 = arith.constant 163 : index
    %c0_59 = arith.constant 0 : index
    %191 = vector.load %arg1[%c163, %c0_59] : memref<176x128xf32, #tpu.memory_space<vmem>>, vector<1x128xf32>
    %192 = vector.broadcast %191 : vector<1x128xf32> to vector<32x128xf32>
    %193 = arith.mulf %192, %41 : vector<32x128xf32>
    %194 = arith.addf %190, %193 : vector<32x128xf32>
    %c164 = arith.constant 164 : index
    %c0_60 = arith.constant 0 : index
    %195 = vector.load %arg1[%c164, %c0_60] : memref<176x128xf32, #tpu.memory_space<vmem>>, vector<1x128xf32>
    %196 = vector.broadcast %195 : vector<1x128xf32> to vector<32x128xf32>
    %197 = arith.mulf %196, %42 : vector<32x128xf32>
    %198 = arith.addf %194, %197 : vector<32x128xf32>
    %c165 = arith.constant 165 : index
    %c0_61 = arith.constant 0 : index
    %199 = vector.load %arg1[%c165, %c0_61] : memref<176x128xf32, #tpu.memory_space<vmem>>, vector<1x128xf32>
    %200 = vector.broadcast %199 : vector<1x128xf32> to vector<32x128xf32>
    %201 = arith.mulf %200, %43 : vector<32x128xf32>
    %202 = arith.addf %198, %201 : vector<32x128xf32>
    %c166 = arith.constant 166 : index
    %c0_62 = arith.constant 0 : index
    %203 = vector.load %arg1[%c166, %c0_62] : memref<176x128xf32, #tpu.memory_space<vmem>>, vector<1x128xf32>
    %204 = vector.broadcast %203 : vector<1x128xf32> to vector<32x128xf32>
    %205 = arith.mulf %204, %44 : vector<32x128xf32>
    %206 = arith.addf %202, %205 : vector<32x128xf32>
    %c167 = arith.constant 167 : index
    %c0_63 = arith.constant 0 : index
    %207 = vector.load %arg1[%c167, %c0_63] : memref<176x128xf32, #tpu.memory_space<vmem>>, vector<1x128xf32>
    %208 = vector.broadcast %207 : vector<1x128xf32> to vector<32x128xf32>
    %209 = arith.mulf %208, %45 : vector<32x128xf32>
    %210 = arith.addf %206, %209 : vector<32x128xf32>
    %c168 = arith.constant 168 : index
    %c0_64 = arith.constant 0 : index
    %211 = vector.load %arg1[%c168, %c0_64] : memref<176x128xf32, #tpu.memory_space<vmem>>, vector<1x128xf32>
    %212 = vector.broadcast %211 : vector<1x128xf32> to vector<32x128xf32>
    %213 = arith.mulf %212, %46 : vector<32x128xf32>
    %214 = arith.addf %210, %213 : vector<32x128xf32>
    %215 = vector.broadcast %40 : vector<1x128xf32> to vector<32x128xf32>
    %216 = arith.mulf %215, %22 : vector<32x128xf32>
    %c154 = arith.constant 154 : index
    %c0_65 = arith.constant 0 : index
    %217 = vector.load %arg1[%c154, %c0_65] : memref<176x128xf32, #tpu.memory_space<vmem>>, vector<1x128xf32>
    %218 = vector.broadcast %217 : vector<1x128xf32> to vector<32x128xf32>
    %219 = arith.mulf %218, %25 : vector<32x128xf32>
    %220 = arith.addf %216, %219 : vector<32x128xf32>
    %c155 = arith.constant 155 : index
    %c0_66 = arith.constant 0 : index
    %221 = vector.load %arg1[%c155, %c0_66] : memref<176x128xf32, #tpu.memory_space<vmem>>, vector<1x128xf32>
    %222 = vector.broadcast %221 : vector<1x128xf32> to vector<32x128xf32>
    %223 = arith.mulf %222, %30 : vector<32x128xf32>
    %224 = arith.addf %220, %223 : vector<32x128xf32>
    %c156 = arith.constant 156 : index
    %c0_67 = arith.constant 0 : index
    %225 = vector.load %arg1[%c156, %c0_67] : memref<176x128xf32, #tpu.memory_space<vmem>>, vector<1x128xf32>
    %226 = vector.broadcast %225 : vector<1x128xf32> to vector<32x128xf32>
    %227 = arith.mulf %226, %35 : vector<32x128xf32>
    %228 = arith.addf %224, %227 : vector<32x128xf32>
    %c169 = arith.constant 169 : index
    %c0_68 = arith.constant 0 : index
    %229 = vector.load %arg1[%c169, %c0_68] : memref<176x128xf32, #tpu.memory_space<vmem>>, vector<1x128xf32>
    %230 = vector.broadcast %229 : vector<1x128xf32> to vector<32x128xf32>
    %231 = arith.mulf %230, %41 : vector<32x128xf32>
    %232 = arith.addf %228, %231 : vector<32x128xf32>
    %c170 = arith.constant 170 : index
    %c0_69 = arith.constant 0 : index
    %233 = vector.load %arg1[%c170, %c0_69] : memref<176x128xf32, #tpu.memory_space<vmem>>, vector<1x128xf32>
    %234 = vector.broadcast %233 : vector<1x128xf32> to vector<32x128xf32>
    %235 = arith.mulf %234, %42 : vector<32x128xf32>
    %236 = arith.addf %232, %235 : vector<32x128xf32>
    %c171 = arith.constant 171 : index
    %c0_70 = arith.constant 0 : index
    %237 = vector.load %arg1[%c171, %c0_70] : memref<176x128xf32, #tpu.memory_space<vmem>>, vector<1x128xf32>
    %238 = vector.broadcast %237 : vector<1x128xf32> to vector<32x128xf32>
    %239 = arith.mulf %238, %43 : vector<32x128xf32>
    %240 = arith.addf %236, %239 : vector<32x128xf32>
    %c172 = arith.constant 172 : index
    %c0_71 = arith.constant 0 : index
    %241 = vector.load %arg1[%c172, %c0_71] : memref<176x128xf32, #tpu.memory_space<vmem>>, vector<1x128xf32>
    %242 = vector.broadcast %241 : vector<1x128xf32> to vector<32x128xf32>
    %243 = arith.mulf %242, %44 : vector<32x128xf32>
    %244 = arith.addf %240, %243 : vector<32x128xf32>
    %c173 = arith.constant 173 : index
    %c0_72 = arith.constant 0 : index
    %245 = vector.load %arg1[%c173, %c0_72] : memref<176x128xf32, #tpu.memory_space<vmem>>, vector<1x128xf32>
    %246 = vector.broadcast %245 : vector<1x128xf32> to vector<32x128xf32>
    %247 = arith.mulf %246, %45 : vector<32x128xf32>
    %248 = arith.addf %244, %247 : vector<32x128xf32>
    %c174 = arith.constant 174 : index
    %c0_73 = arith.constant 0 : index
    %249 = vector.load %arg1[%c174, %c0_73] : memref<176x128xf32, #tpu.memory_space<vmem>>, vector<1x128xf32>
    %250 = vector.broadcast %249 : vector<1x128xf32> to vector<32x128xf32>
    %251 = arith.mulf %250, %46 : vector<32x128xf32>
    %252 = arith.addf %248, %251 : vector<32x128xf32>
    %cst_74 = arith.constant dense<0.000000e+00> : vector<32x128xf32>
    %253 = tpu.matmul %3, %138, %cst_74 {dimension_numbers = #tpu.dot_dimension_numbers<[1], [0], [0], [1], [0, 0, 1, 1], [], []>} : vector<32x32xf32>, vector<32x128xf32>, vector<32x128xf32> -> vector<32x128xf32>
    %254 = vector.broadcast %6 : vector<32x1xf32> to vector<32x128xf32>
    %255 = arith.addf %253, %254 : vector<32x128xf32>
    %cst_75 = arith.constant 0.000000e+00 : f32
    %256 = vector.broadcast %cst_75 : f32 to vector<32x128xf32>
    %257 = arith.subf %256, %255 : vector<32x128xf32>
    %258 = math.exp %257 : vector<32x128xf32>
    %cst_76 = arith.constant 1.000000e+00 : f32
    %259 = vector.broadcast %cst_76 : f32 to vector<32x128xf32>
    %260 = arith.addf %259, %258 : vector<32x128xf32>
    %cst_77 = arith.constant 1.000000e+00 : f32
    %261 = vector.broadcast %cst_77 : f32 to vector<32x128xf32>
    %262 = arith.divf %261, %260 : vector<32x128xf32>
    %263 = arith.mulf %255, %262 : vector<32x128xf32>
    %264 = tpu.concatenate %263, %176, %214, %252 in 0 : vector<32x128xf32>, vector<32x128xf32>, vector<32x128xf32>, vector<32x128xf32> -> vector<128x128xf32>
    %c0_78 = arith.constant 0 : index
    %c0_79 = arith.constant 0 : index
    %265 = vector.load %arg3[%c0_78, %c0_79] : memref<64x128xf32, #tpu.memory_space<vmem>>, vector<64x128xf32>
    %cst_80 = arith.constant dense<0.000000e+00> : vector<64x128xf32>
    %266 = tpu.matmul %265, %264, %cst_80 {dimension_numbers = #tpu.dot_dimension_numbers<[1], [0], [0], [1], [0, 0, 1, 1], [], []>} : vector<64x128xf32>, vector<128x128xf32>, vector<64x128xf32> -> vector<64x128xf32>
    %267 = vector.broadcast %7 : vector<64x1xf32> to vector<64x128xf32>
    %268 = arith.addf %266, %267 : vector<64x128xf32>
    %c0_81 = arith.constant 0 : index
    %c0_82 = arith.constant 0 : index
    %269 = vector.load %arg5[%c0_81, %c0_82] : memref<64x128xf32, #tpu.memory_space<vmem>>, vector<64x128xf32>
    tpu.vector_store %arg5[%c0_81, %c0_82], %268 {strides = array<i32>} : memref<64x128xf32, #tpu.memory_space<vmem>>, vector<64x128xf32>,
    return
  }
  func.func @transform_0(%arg0: i32) -> (i32, i32) {
    %c0_i32 = arith.constant 0 : i32
    %c0_i32_0 = arith.constant 0 : i32
    return %c0_i32, %arg0 : i32, i32
  }
  func.func @transform_1(%arg0: i32) -> (i32, i32) {
    %c0_i32 = arith.constant 0 : i32
    %c0_i32_0 = arith.constant 0 : i32
    %c0_i32_1 = arith.constant 0 : i32
    return %c0_i32, %c0_i32_0 : i32, i32
  }
  func.func @transform_2(%arg0: i32) -> (i32, i32) {
    %c0_i32 = arith.constant 0 : i32
    %c0_i32_0 = arith.constant 0 : i32
    %c0_i32_1 = arith.constant 0 : i32
    return %c0_i32, %c0_i32_0 : i32, i32
  }
  func.func @transform_3(%arg0: i32) -> (i32, i32) {
    %c0_i32 = arith.constant 0 : i32
    %c0_i32_0 = arith.constant 0 : i32
    %c0_i32_1 = arith.constant 0 : i32
    return %c0_i32, %c0_i32_0 : i32, i32
  }
  func.func @transform_4(%arg0: i32) -> (i32, i32) {
    %c0_i32 = arith.constant 0 : i32
    %c0_i32_0 = arith.constant 0 : i32
    return %c0_i32, %arg0 : i32, i32
  }
}

</mosaic_0001>

<llo_original>
// kernel: multipole_interaction_pallas.1
$region0: #{multipole_interaction_pallas.1}
  #allocation0 [shape = 'u32[]', space=smem, size = 0x4, offset = 0x4, fixed_abs, tag = 'smem constant byte address 0x4 - core index']
  #allocation1 [shape = 'u32[72,128]{1,0:T(1,128)}', space=vmem, size = 0x9000, scoped, tag = 'internal scratch']
  %s0 = inlined_call_operand.vmem [shape: f32[176,128], index: 0, kind: input, shape index: {}]
  %s1 = inlined_call_operand.vmem [shape: f32[192,32], index: 1, kind: input, shape index: {}]
  %s2 = inlined_call_operand.vmem [shape: f32[64,128], index: 2, kind: input, shape index: {}]
  %s3 = inlined_call_operand.vmem [shape: f32[160,1], index: 3, kind: input, shape index: {}]
  %s4 = inlined_call_operand.vmem [shape: f32[64,128], index: 4, kind: output, shape index: {}]
  %s5 = sld [smem:[#allocation0]]
  $region26: #{multipole_interaction_pallas.1} parent=0
    _
  %s7 = ssub.s32 1, %s5
  %s8 = scalar_select 0, %s7, %s5
  // Predicated region
  $region2: #{multipole_interaction_pallas.1} parent=0 // pred_check
    _
  $region3: #{multipole_interaction_pallas.1} parent=0 // pred_check_branch
    %10 = sbr.rel (0) target = $region5
  $region4: #{multipole_interaction_pallas.1} parent=0 // pred_region
    _
  $region5: #{multipole_interaction_pallas.1} parent=0 // pred_fallthru
    _
  // Predicated region
  $region6: #{multipole_interaction_pallas.1} parent=0 // pred_check
    _
  $region7: #{multipole_interaction_pallas.1} parent=0 // pred_check_branch
    %12 = sbr.rel (0) target = $region9
  $region8: #{multipole_interaction_pallas.1} parent=0 // pred_region
    _
  $region9: #{multipole_interaction_pallas.1} parent=0 // pred_fallthru
    _
  // Predicated region
  $region10: #{multipole_interaction_pallas.1} parent=0 // pred_check
    _
  $region11: #{multipole_interaction_pallas.1} parent=0 // pred_check_branch
    %14 = sbr.rel (0) target = $region13
  $region12: #{multipole_interaction_pallas.1} parent=0 // pred_region
    _
  $region13: #{multipole_interaction_pallas.1} parent=0 // pred_fallthru
    _
  // Predicated region
  $region14: #{multipole_interaction_pallas.1} parent=0 // pred_check
    _
  $region15: #{multipole_interaction_pallas.1} parent=0 // pred_check_branch
    %16 = sbr.rel (0) target = $region17
  $region16: #{multipole_interaction_pallas.1} parent=0 // pred_region
    _
  $region17: #{multipole_interaction_pallas.1} parent=0 // pred_fallthru
    _
  %v17 = vld [vmem:[%s1] sm:$0xff]
  %v18 = vld [vmem:[%s1 + $0x8] sm:$0xff]
  %v19 = vld [vmem:[%s1 + $0x10] sm:$0xff]
  %v20 = vld [vmem:[%s1 + $0x18] sm:$0xff]
  %v21 = vld [vmem:[%s1 + $0x20] sm:$0xff]
  %v22 = vld [vmem:[%s1 + $0x28] sm:$0xff]
  %v23 = vld [vmem:[%s1 + $0x30] sm:$0xff]
  %v24 = vld [vmem:[%s1 + $0x38] sm:$0xff]
  %v25 = vld [vmem:[%s1 + $0x40] sm:$0xff]
  %v26 = vld [vmem:[%s1 + $0x48] sm:$0xff]
  %v27 = vld [vmem:[%s1 + $0x50] sm:$0xff]
  %v28 = vld [vmem:[%s1 + $0x58] sm:$0xff]
  %v29 = vld [vmem:[%s1 + $0x60] sm:$0xff]
  %v30 = vld [vmem:[%s1 + $0x68] sm:$0xff]
  %v31 = vld [vmem:[%s1 + $0x70] sm:$0xff]
  %v32 = vld [vmem:[%s1 + $0x78] sm:$0xff]
  %v33 = vld [vmem:[%s1 + $0x80] sm:$0xff]
  %v34 = vld [vmem:[%s1 + $0x88] sm:$0xff]
  %v35 = vld [vmem:[%s1 + $0x90] sm:$0xff]
  %v36 = vld [vmem:[%s1 + $0x98] sm:$0xff]
  %v37 = vld [vmem:[%s1 + $0xa0] sm:$0xff]
  %v38 = vld [vmem:[%s1 + $0xa8] sm:$0xff]
  %v39 = vld [vmem:[%s1 + $0xb0] sm:$0xff]
  %v40 = vld [vmem:[%s1 + $0xb8] sm:$0xff]
  %v41 = vld [vmem:[%s3] sm:$0xff]
  %v42 = vld [vmem:[%s3 + $0x8] sm:$0xff]
  %v43 = vld [vmem:[%s3 + $0x10] sm:$0xff]
  %v44 = vld [vmem:[%s3 + $0x18] sm:$0xff]
  %v45 = vld [vmem:[%s3 + $0x20] sm:$0xff]
  %v46 = vld [vmem:[%s3 + $0x28] sm:$0xff]
  %v47 = vld [vmem:[%s3 + $0x30] sm:$0xff]
  %v48 = vld [vmem:[%s3 + $0x38] sm:$0xff]
  %v49 = vld [vmem:[%s3 + $0x40] sm:$0xff]
  %v50 = vld [vmem:[%s3 + $0x48] sm:$0xff]
  %v51 = vld [vmem:[%s3 + $0x50] sm:$0xff]
  %v52 = vld [vmem:[%s3 + $0x58] sm:$0xff]
  %v53 = vld [vmem:[%s3 + $0x60] sm:$0xff]
  %v54 = vld [vmem:[%s3 + $0x68] sm:$0xff]
  %v55 = vld [vmem:[%s3 + $0x70] sm:$0xff]
  %v56 = vld [vmem:[%s3 + $0x78] sm:$0xff]
  %v57 = vld [vmem:[%s3 + $0x80] sm:$0xff]
  %v58 = vld [vmem:[%s3 + $0x88] sm:$0xff]
  %v59 = vld [vmem:[%s3 + $0x90] sm:$0xff]
  %v60 = vld [vmem:[%s3 + $0x98] sm:$0xff]
  %v61 = vld [vmem:[%s0] sm:$0xff]
  %v62 = vld [vmem:[%s0 + $0x8] sm:$0xff]
  %v63 = vld [vmem:[%s0 + $0x10] sm:$0xff]
  %v64 = vld [vmem:[%s0 + $0x18] sm:$0xff]
  %66 = vset.pattern.permute.xlu0 0
  %67 = vperm.xlu0 %66, %v41
  %v68 = vpop.permute.xlu0 %67
  %71 = vset.pattern.permute.xlu0 0
  %72 = vperm.xlu0 %71, %v42
  %v73 = vpop.permute.xlu0 %72
  %76 = vset.pattern.permute.xlu0 0
  %77 = vperm.xlu0 %76, %v43
  %v78 = vpop.permute.xlu0 %77
  %81 = vset.pattern.permute.xlu0 0
  %82 = vperm.xlu0 %81, %v44
  %v83 = vpop.permute.xlu0 %82
  %vm85 = vcmask 261120
  %v87 = vsel %vm85, %v17, 0
  %v90 = vsel %vm85, %v18, 0
  %v93 = vsel %vm85, %v19, 0
  %v96 = vsel %vm85, %v20, 0
  %98 = vmatpush.msra.mxu0 0.0
  %99 = vmatpush.msra.mxu0 0.0
  %100 = vmatpush.msra.mxu0 0.0
  %101 = vmatpush.msra.mxu0 0.0
  %102 = vmatpush.msra.mxu0 0.0
  %103 = vmatpush.msra.mxu0 0.0
  %104 = vmatpush.msra.mxu0 0.0
  %105 = vmatpush.msra.mxu0 0.0
  %106 = vmatpush.msra.mxu0 0.0
  %107 = vmatpush.msra.mxu0 0.0
  %108 = vmatpush.msra.mxu0 0.0
  %109 = vmatpush.msra.mxu0 0.0
  %110 = vmatpush.msra.mxu0 %v64
  %111 = vmatpush.msra.mxu0 %v63
  %112 = vmatpush.msra.mxu0 %v62
  %113 = vmatpush.msra.mxu0 %v61
  %114 = vmatmul.f32.gmra.mxu0 %v87
  %v115 = vpop.f32.mrf.mxu0
  %v116 = vadd.f32 %v68, %v115
  %117 = vmatmul.f32.gmra.mxu0 %v90
  %v118 = vpop.f32.mrf.mxu0
  %v119 = vadd.f32 %v73, %v118
  %120 = vmatmul.f32.gmra.mxu0 %v93
  %v121 = vpop.f32.mrf.mxu0
  %v122 = vadd.f32 %v78, %v121
  %123 = vmatmul.f32.gmra.mxu0 %v96
  %v124 = vpop.f32.mrf.mxu0
  %v125 = vadd.f32 %v83, %v124
  %126 = vdwg.mxu0
  %v127 = vsub.f32 0.0, %v116
  %v128 = vsub.f32 0.0, %v119
  %v129 = vsub.f32 0.0, %v122
  %v130 = vsub.f32 0.0, %v125
  %v131 = vmul.f32 %v127, 1.442695
  %v132 = vpow.pop %v131
  %v133 = vmul.f32 %v128, 1.442695
  %v134 = vpow.pop %v133
  %v135 = vmul.f32 %v129, 1.442695
  %v136 = vpow.pop %v135
  %v137 = vmul.f32 %v130, 1.442695
  %v138 = vpow.pop %v137
  %v139 = vadd.f32 %v132, 1.0
  %v140 = vadd.f32 %v134, 1.0
  %v141 = vadd.f32 %v136, 1.0
  %v142 = vadd.f32 %v138, 1.0
  %v143 = vrcp.pop %v139
  %v144 = vmul.f32 %v139, %v143
  %v145 = vsub.f32 1.0, %v144
  %v146 = vmul.f32 %v143, %v145
  %v147 = vadd.f32 %v143, %v146
  %vm148 = vweird.f32 %v139
  %vm149 = vweird.f32 %v143
  %vm150 = vmor %vm148, %vm149
  %v151 = vsel %vm150, %v143, %v147
  %v152 = vand.u32 2147483647, %v139
  %vm153 = vcmp.eq.f32.partialorder %v152, 8.507059e+37
  %v154 = vand.u32 %v139, 2147483648
  %v155 = vor.u32 1.1754944e-38, %v154
  %v156 = vsel %vm153, %v155, %v151
  %v157 = vmul.f32 1.0, %v156
  %v158 = vrcp.pop %v140
  %v159 = vmul.f32 %v140, %v158
  %v160 = vsub.f32 1.0, %v159
  %v161 = vmul.f32 %v158, %v160
  %v162 = vadd.f32 %v158, %v161
  %vm163 = vweird.f32 %v140
  %vm164 = vweird.f32 %v158
  %vm165 = vmor %vm163, %vm164
  %v166 = vsel %vm165, %v158, %v162
  %v167 = vand.u32 2147483647, %v140
  %vm168 = vcmp.eq.f32.partialorder %v167, 8.507059e+37
  %v169 = vand.u32 %v140, 2147483648
  %v170 = vor.u32 1.1754944e-38, %v169
  %v171 = vsel %vm168, %v170, %v166
  %v172 = vmul.f32 1.0, %v171
  %v173 = vrcp.pop %v141
  %v174 = vmul.f32 %v141, %v173
  %v175 = vsub.f32 1.0, %v174
  %v176 = vmul.f32 %v173, %v175
  %v177 = vadd.f32 %v173, %v176
  %vm178 = vweird.f32 %v141
  %vm179 = vweird.f32 %v173
  %vm180 = vmor %vm178, %vm179
  %v181 = vsel %vm180, %v173, %v177
  %v182 = vand.u32 2147483647, %v141
  %vm183 = vcmp.eq.f32.partialorder %v182, 8.507059e+37
  %v184 = vand.u32 %v141, 2147483648
  %v185 = vor.u32 1.1754944e-38, %v184
  %v186 = vsel %vm183, %v185, %v181
  %v187 = vmul.f32 1.0, %v186
  %v188 = vrcp.pop %v142
  %v189 = vmul.f32 %v142, %v188
  %v190 = vsub.f32 1.0, %v189
  %v191 = vmul.f32 %v188, %v190
  %v192 = vadd.f32 %v188, %v191
  %vm193 = vweird.f32 %v142
  %vm194 = vweird.f32 %v188
  %vm195 = vmor %vm193, %vm194
  %v196 = vsel %vm195, %v188, %v192
  %v197 = vand.u32 2147483647, %v142
  %vm198 = vcmp.eq.f32.partialorder %v197, 8.507059e+37
  %v199 = vand.u32 %v142, 2147483648
  %v200 = vor.u32 1.1754944e-38, %v199
  %v201 = vsel %vm198, %v200, %v196
  %v202 = vmul.f32 1.0, %v201
  %v203 = vmul.f32 %v116, %v157
  %v204 = vmul.f32 %v119, %v172
  %v205 = vmul.f32 %v122, %v187
  %v206 = vmul.f32 %v125, %v202
  %208 = vset.pattern.permute.xlu0 0
  %209 = vperm.xlu0 %208, %v45
  %v210 = vpop.permute.xlu0 %209
  %213 = vset.pattern.permute.xlu0 0
  %214 = vperm.xlu0 %213, %v46
  %v215 = vpop.permute.xlu0 %214
  %218 = vset.pattern.permute.xlu0 0
  %219 = vperm.xlu0 %218, %v47
  %v220 = vpop.permute.xlu0 %219
  %223 = vset.pattern.permute.xlu0 0
  %224 = vperm.xlu0 %223, %v48
  %v225 = vpop.permute.xlu0 %224
  %v228 = vsel %vm85, %v21, 0
  %v231 = vsel %vm85, %v22, 0
  %v234 = vsel %vm85, %v23, 0
  %v237 = vsel %vm85, %v24, 0
  %239 = vmatpush.msra.mxu0 0.0
  %240 = vmatpush.msra.mxu0 0.0
  %241 = vmatpush.msra.mxu0 0.0
  %242 = vmatpush.msra.mxu0 0.0
  %243 = vmatpush.msra.mxu0 0.0
  %244 = vmatpush.msra.mxu0 0.0
  %245 = vmatpush.msra.mxu0 0.0
  %246 = vmatpush.msra.mxu0 0.0
  %247 = vmatpush.msra.mxu0 0.0
  %248 = vmatpush.msra.mxu0 0.0
  %249 = vmatpush.msra.mxu0 0.0
  %250 = vmatpush.msra.mxu0 0.0
  %251 = vmatpush.msra.mxu0 %v206
  %252 = vmatpush.msra.mxu0 %v205
  %253 = vmatpush.msra.mxu0 %v204
  %254 = vmatpush.msra.mxu0 %v203
  %255 = vmatmul.f32.gmra.mxu0 %v228
  %v256 = vpop.f32.mrf.mxu0
  %v257 = vadd.f32 %v210, %v256
  %258 = vmatmul.f32.gmra.mxu0 %v231
  %v259 = vpop.f32.mrf.mxu0
  %v260 = vadd.f32 %v215, %v259
  %261 = vmatmul.f32.gmra.mxu0 %v234
  %v262 = vpop.f32.mrf.mxu0
  %v263 = vadd.f32 %v220, %v262
  %264 = vmatmul.f32.gmra.mxu0 %v237
  %v265 = vpop.f32.mrf.mxu0
  %v266 = vadd.f32 %v225, %v265
  %267 = vdwg.mxu0
  %v268 = vld [vmem:[%s0 + $0x20] sm:$0xff]
  %v269 = vld [vmem:[%s0 + $0x28] sm:$0xff]
  %v270 = vld [vmem:[%s0 + $0x30] sm:$0xff]
  %v271 = vld [vmem:[%s0 + $0x38] sm:$0xff]
  %v273 = vsel %vm85, %v25, 0
  %v276 = vsel %vm85, %v26, 0
  %v279 = vsel %vm85, %v27, 0
  %v282 = vsel %vm85, %v28, 0
  %v285 = vsel %vm85, %v29, 0
  %v288 = vsel %vm85, %v30, 0
  %v291 = vsel %vm85, %v31, 0
  %v294 = vsel %vm85, %v32, 0
  %v297 = vsel %vm85, %v33, 0
  %v300 = vsel %vm85, %v34, 0
  %v303 = vsel %vm85, %v35, 0
  %v306 = vsel %vm85, %v36, 0
  %308 = vmatpush.msra.mxu0 0.0
  %309 = vmatpush.msra.mxu0 0.0
  %310 = vmatpush.msra.mxu0 0.0
  %311 = vmatpush.msra.mxu0 0.0
  %312 = vmatpush.msra.mxu0 0.0
  %313 = vmatpush.msra.mxu0 0.0
  %314 = vmatpush.msra.mxu0 0.0
  %315 = vmatpush.msra.mxu0 0.0
  %316 = vmatpush.msra.mxu0 0.0
  %317 = vmatpush.msra.mxu0 0.0
  %318 = vmatpush.msra.mxu0 0.0
  %319 = vmatpush.msra.mxu0 0.0
  %320 = vmatpush.msra.mxu0 %v271
  %321 = vmatpush.msra.mxu0 %v270
  %322 = vmatpush.msra.mxu0 %v269
  %323 = vmatpush.msra.mxu0 %v268
  %324 = vmatmul.f32.gmra.mxu0 %v273
  %v325 = vpop.f32.mrf.mxu0
  %v326 = vadd.f32 0.0, %v325
  %327 = vmatmul.f32.gmra.mxu0 %v276
  %v328 = vpop.f32.mrf.mxu0
  %v329 = vadd.f32 0.0, %v328
  %330 = vmatmul.f32.gmra.mxu0 %v279
  %v331 = vpop.f32.mrf.mxu0
  %v332 = vadd.f32 0.0, %v331
  %333 = vmatmul.f32.gmra.mxu0 %v282
  %v334 = vpop.f32.mrf.mxu0
  %v335 = vadd.f32 0.0, %v334
  %336 = vmatmul.f32.gmra.mxu0 %v285
  %v337 = vpop.f32.mrf.mxu0
  %v338 = vadd.f32 0.0, %v337
  %339 = vmatmul.f32.gmra.mxu0 %v288
  %v340 = vpop.f32.mrf.mxu0
  %v341 = vadd.f32 0.0, %v340
  %342 = vmatmul.f32.gmra.mxu0 %v291
  %v343 = vpop.f32.mrf.mxu0
  %v344 = vadd.f32 0.0, %v343
  %345 = vmatmul.f32.gmra.mxu0 %v294
  %v346 = vpop.f32.mrf.mxu0
  %v347 = vadd.f32 0.0, %v346
  %348 = vmatmul.f32.gmra.mxu0 %v297
  %v349 = vpop.f32.mrf.mxu0
  %v350 = vadd.f32 0.0, %v349
  %351 = vmatmul.f32.gmra.mxu0 %v300
  %v352 = vpop.f32.mrf.mxu0
  %v353 = vadd.f32 0.0, %v352
  %354 = vmatmul.f32.gmra.mxu0 %v303
  %v355 = vpop.f32.mrf.mxu0
  %v356 = vadd.f32 0.0, %v355
  %357 = vmatmul.f32.gmra.mxu0 %v306
  %v358 = vpop.f32.mrf.mxu0
  %v359 = vadd.f32 0.0, %v358
  %360 = vdwg.mxu0
  %v361 = vld [vmem:[%s0 + $0x40] sm:$0xff]
  %v362 = vld [vmem:[%s0 + $0x48] sm:$0xff]
  %v363 = vld [vmem:[%s0 + $0x50] sm:$0xff]
  %v364 = vld [vmem:[%s0 + $0x58] sm:$0xff]
  %365 = vmatpush.msra.mxu0 0.0
  %366 = vmatpush.msra.mxu0 0.0
  %367 = vmatpush.msra.mxu0 0.0
  %368 = vmatpush.msra.mxu0 0.0
  %369 = vmatpush.msra.mxu0 0.0
  %370 = vmatpush.msra.mxu0 0.0
  %371 = vmatpush.msra.mxu0 0.0
  %372 = vmatpush.msra.mxu0 0.0
  %373 = vmatpush.msra.mxu0 0.0
  %374 = vmatpush.msra.mxu0 0.0
  %375 = vmatpush.msra.mxu0 0.0
  %376 = vmatpush.msra.mxu0 0.0
  %377 = vmatpush.msra.mxu0 %v364
  %378 = vmatpush.msra.mxu0 %v363
  %379 = vmatpush.msra.mxu0 %v362
  %380 = vmatpush.msra.mxu0 %v361
  %381 = vmatmul.f32.gmra.mxu0 %v273
  %v382 = vpop.f32.mrf.mxu0
  %v383 = vadd.f32 0.0, %v382
  %384 = vmatmul.f32.gmra.mxu0 %v276
  %v385 = vpop.f32.mrf.mxu0
  %v386 = vadd.f32 0.0, %v385
  %387 = vmatmul.f32.gmra.mxu0 %v279
  %v388 = vpop.f32.mrf.mxu0
  %v389 = vadd.f32 0.0, %v388
  %390 = vmatmul.f32.gmra.mxu0 %v282
  %v391 = vpop.f32.mrf.mxu0
  %v392 = vadd.f32 0.0, %v391
  %393 = vmatmul.f32.gmra.mxu0 %v285
  %v394 = vpop.f32.mrf.mxu0
  %v395 = vadd.f32 0.0, %v394
  %396 = vmatmul.f32.gmra.mxu0 %v288
  %v397 = vpop.f32.mrf.mxu0
  %v398 = vadd.f32 0.0, %v397
  %399 = vmatmul.f32.gmra.mxu0 %v291
  %v400 = vpop.f32.mrf.mxu0
  %v401 = vadd.f32 0.0, %v400
  %402 = vmatmul.f32.gmra.mxu0 %v294
  %v403 = vpop.f32.mrf.mxu0
  %v404 = vadd.f32 0.0, %v403
  %405 = vmatmul.f32.gmra.mxu0 %v297
  %v406 = vpop.f32.mrf.mxu0
  %v407 = vadd.f32 0.0, %v406
  %408 = vmatmul.f32.gmra.mxu0 %v300
  %v409 = vpop.f32.mrf.mxu0
  %v410 = vadd.f32 0.0, %v409
  %411 = vmatmul.f32.gmra.mxu0 %v303
  %v412 = vpop.f32.mrf.mxu0
  %v413 = vadd.f32 0.0, %v412
  %414 = vmatmul.f32.gmra.mxu0 %v306
  %v415 = vpop.f32.mrf.mxu0
  %v416 = vadd.f32 0.0, %v415
  %417 = vdwg.mxu0
  %v418 = vld [vmem:[%s0 + $0x60] sm:$0xff]
  %v419 = vld [vmem:[%s0 + $0x68] sm:$0xff]
  %v420 = vld [vmem:[%s0 + $0x70] sm:$0xff]
  %v421 = vld [vmem:[%s0 + $0x78] sm:$0xff]
  %422 = vmatpush.msra.mxu0 0.0
  %423 = vmatpush.msra.mxu0 0.0
  %424 = vmatpush.msra.mxu0 0.0
  %425 = vmatpush.msra.mxu0 0.0
  %426 = vmatpush.msra.mxu0 0.0
  %427 = vmatpush.msra.mxu0 0.0
  %428 = vmatpush.msra.mxu0 0.0
  %429 = vmatpush.msra.mxu0 0.0
  %430 = vmatpush.msra.mxu0 0.0
  %431 = vmatpush.msra.mxu0 0.0
  %432 = vmatpush.msra.mxu0 0.0
  %433 = vmatpush.msra.mxu0 0.0
  %434 = vmatpush.msra.mxu0 %v421
  %435 = vmatpush.msra.mxu0 %v420
  %436 = vmatpush.msra.mxu0 %v419
  %437 = vmatpush.msra.mxu0 %v418
  %438 = vmatmul.f32.gmra.mxu0 %v273
  %v439 = vpop.f32.mrf.mxu0
  %v440 = vadd.f32 0.0, %v439
  %441 = vmatmul.f32.gmra.mxu0 %v276
  %v442 = vpop.f32.mrf.mxu0
  %v443 = vadd.f32 0.0, %v442
  %444 = vmatmul.f32.gmra.mxu0 %v279
  %v445 = vpop.f32.mrf.mxu0
  %v446 = vadd.f32 0.0, %v445
  %447 = vmatmul.f32.gmra.mxu0 %v282
  %v448 = vpop.f32.mrf.mxu0
  %v449 = vadd.f32 0.0, %v448
  %450 = vmatmul.f32.gmra.mxu0 %v285
  %v451 = vpop.f32.mrf.mxu0
  %v452 = vadd.f32 0.0, %v451
  %453 = vmatmul.f32.gmra.mxu0 %v288
  %v454 = vpop.f32.mrf.mxu0
  %v455 = vadd.f32 0.0, %v454
  %456 = vmatmul.f32.gmra.mxu0 %v291
  %v457 = vpop.f32.mrf.mxu0
  %v458 = vadd.f32 0.0, %v457
  %459 = vmatmul.f32.gmra.mxu0 %v294
  %v460 = vpop.f32.mrf.mxu0
  %v461 = vadd.f32 0.0, %v460
  %462 = vmatmul.f32.gmra.mxu0 %v297
  %v463 = vpop.f32.mrf.mxu0
  %v464 = vadd.f32 0.0, %v463
  %465 = vmatmul.f32.gmra.mxu0 %v300
  %v466 = vpop.f32.mrf.mxu0
  %v467 = vadd.f32 0.0, %v466
  %468 = vmatmul.f32.gmra.mxu0 %v303
  %v469 = vpop.f32.mrf.mxu0
  %v470 = vadd.f32 0.0, %v469
  %471 = vmatmul.f32.gmra.mxu0 %v306
  %v472 = vpop.f32.mrf.mxu0
  %v473 = vadd.f32 0.0, %v472
  %474 = vdwg.mxu0
  %v475 = vld [vmem:[%s0 + $0x81] sm:$0x1]
  %v476 = vld [vmem:[%s0 + $0x82] sm:$0x1]
  %v477 = vld [vmem:[%s0 + $0x83] sm:$0x1]
  %v478 = vmul.f32 %v338, %v338
  %v479 = vmul.f32 %v341, %v341
  %v480 = vmul.f32 %v344, %v344
  %v481 = vmul.f32 %v347, %v347
  %v482 = vmul.f32 %v395, %v395
  %v483 = vmul.f32 %v398, %v398
  %v484 = vmul.f32 %v401, %v401
  %v485 = vmul.f32 %v404, %v404
  %v486 = vmul.f32 %v452, %v452
  %v487 = vmul.f32 %v455, %v455
  %v488 = vmul.f32 %v458, %v458
  %v489 = vmul.f32 %v461, %v461
  %v490 = vmul.f32 %v338, %v395
  %v491 = vmul.f32 %v341, %v398
  %v492 = vmul.f32 %v344, %v401
  %v493 = vmul.f32 %v347, %v404
  %v494 = vmul.f32 %v338, %v452
  %v495 = vmul.f32 %v341, %v455
  %v496 = vmul.f32 %v344, %v458
  %v497 = vmul.f32 %v347, %v461
  %v498 = vmul.f32 %v395, %v452
  %v499 = vmul.f32 %v398, %v455
  %v500 = vmul.f32 %v401, %v458
  %v501 = vmul.f32 %v404, %v461
  %v502 = vld [vmem:[%s0 + $0x80] sm:$0x1]
  %v503 = vperm.slane %v502, 0
  %v504 = vmul.f32 %v503, %v257
  %v505 = vmul.f32 %v503, %v260
  %v506 = vmul.f32 %v503, %v263
  %v507 = vmul.f32 %v503, %v266
  %v508 = vperm.slane %v475, 0
  %v509 = vmul.f32 %v508, %v326
  %v510 = vmul.f32 %v508, %v329
  %v511 = vmul.f32 %v508, %v332
  %v512 = vmul.f32 %v508, %v335
  %v513 = vadd.f32 %v504, %v509
  %v514 = vadd.f32 %v505, %v510
  %v515 = vadd.f32 %v506, %v511
  %v516 = vadd.f32 %v507, %v512
  %v517 = vperm.slane %v476, 0
  %v518 = vmul.f32 %v517, %v383
  %v519 = vmul.f32 %v517, %v386
  %v520 = vmul.f32 %v517, %v389
  %v521 = vmul.f32 %v517, %v392
  %v522 = vadd.f32 %v513, %v518
  %v523 = vadd.f32 %v514, %v519
  %v524 = vadd.f32 %v515, %v520
  %v525 = vadd.f32 %v516, %v521
  %v526 = vperm.slane %v477, 0
  %v527 = vmul.f32 %v526, %v440
  %v528 = vmul.f32 %v526, %v443
  %v529 = vmul.f32 %v526, %v446
  %v530 = vmul.f32 %v526, %v449
  %v531 = vadd.f32 %v522, %v527
  %v532 = vadd.f32 %v523, %v528
  %v533 = vadd.f32 %v524, %v529
  %v534 = vadd.f32 %v525, %v530
  %v535 = vld [vmem:[%s0 + $0x84] sm:$0x1]
  %v536 = vperm.slane %v535, 0
  %v537 = vmul.f32 %v536, %v478
  %v538 = vmul.f32 %v536, %v479
  %v539 = vmul.f32 %v536, %v480
  %v540 = vmul.f32 %v536, %v481
  %v541 = vadd.f32 %v531, %v537
  %v542 = vadd.f32 %v532, %v538
  %v543 = vadd.f32 %v533, %v539
  %v544 = vadd.f32 %v534, %v540
  %v545 = vld [vmem:[%s0 + $0x85] sm:$0x1]
  %v546 = vperm.slane %v545, 0
  %v547 = vmul.f32 %v546, %v482
  %v548 = vmul.f32 %v546, %v483
  %v549 = vmul.f32 %v546, %v484
  %v550 = vmul.f32 %v546, %v485
  %v551 = vadd.f32 %v541, %v547
  %v552 = vadd.f32 %v542, %v548
  %v553 = vadd.f32 %v543, %v549
  %v554 = vadd.f32 %v544, %v550
  %v555 = vld [vmem:[%s0 + $0x86] sm:$0x1]
  %v556 = vperm.slane %v555, 0
  %v557 = vmul.f32 %v556, %v486
  %v558 = vmul.f32 %v556, %v487
  %v559 = vmul.f32 %v556, %v488
  %v560 = vmul.f32 %v556, %v489
  %v561 = vadd.f32 %v551, %v557
  %v562 = vadd.f32 %v552, %v558
  %v563 = vadd.f32 %v553, %v559
  %v564 = vadd.f32 %v554, %v560
  %v565 = vld [vmem:[%s0 + $0x87] sm:$0x1]
  %v566 = vperm.slane %v565, 0
  %v567 = vmul.f32 %v566, %v490
  %v568 = vmul.f32 %v566, %v491
  %v569 = vmul.f32 %v566, %v492
  %v570 = vmul.f32 %v566, %v493
  %v571 = vadd.f32 %v561, %v567
  %v572 = vadd.f32 %v562, %v568
  %v573 = vadd.f32 %v563, %v569
  %v574 = vadd.f32 %v564, %v570
  %v575 = vld [vmem:[%s0 + $0x88] sm:$0x1]
  %v576 = vperm.slane %v575, 0
  %v577 = vmul.f32 %v576, %v494
  %v578 = vmul.f32 %v576, %v495
  %v579 = vmul.f32 %v576, %v496
  %v580 = vmul.f32 %v576, %v497
  %v581 = vadd.f32 %v571, %v577
  %v582 = vadd.f32 %v572, %v578
  %v583 = vadd.f32 %v573, %v579
  %v584 = vadd.f32 %v574, %v580
  %v585 = vld [vmem:[%s0 + $0x89] sm:$0x1]
  %v586 = vperm.slane %v585, 0
  %v587 = vmul.f32 %v586, %v498
  %v588 = vmul.f32 %v586, %v499
  %v589 = vmul.f32 %v586, %v500
  %v590 = vmul.f32 %v586, %v501
  %v591 = vadd.f32 %v581, %v587
  %v592 = vadd.f32 %v582, %v588
  %v593 = vadd.f32 %v583, %v589
  %v594 = vadd.f32 %v584, %v590
  %v595 = vmul.f32 %v350, %v350
  %v596 = vmul.f32 %v353, %v353
  %v597 = vmul.f32 %v356, %v356
  %v598 = vmul.f32 %v359, %v359
  %v599 = vmul.f32 %v407, %v407
  %v600 = vmul.f32 %v410, %v410
  %v601 = vmul.f32 %v413, %v413
  %v602 = vmul.f32 %v416, %v416
  %v603 = vmul.f32 %v464, %v464
  %v604 = vmul.f32 %v467, %v467
  %v605 = vmul.f32 %v470, %v470
  %v606 = vmul.f32 %v473, %v473
  %v607 = vmul.f32 %v350, %v407
  %v608 = vmul.f32 %v353, %v410
  %v609 = vmul.f32 %v356, %v413
  %v610 = vmul.f32 %v359, %v416
  %v611 = vmul.f32 %v350, %v464
  %v612 = vmul.f32 %v353, %v467
  %v613 = vmul.f32 %v356, %v470
  %v614 = vmul.f32 %v359, %v473
  %v615 = vmul.f32 %v407, %v464
  %v616 = vmul.f32 %v410, %v467
  %v617 = vmul.f32 %v413, %v470
  %v618 = vmul.f32 %v416, %v473
  %v619 = vld [vmem:[%s0 + $0x8a] sm:$0x1]
  %v620 = vmul.f32 %v595, %v350
  %v621 = vmul.f32 %v596, %v353
  %v622 = vmul.f32 %v597, %v356
  %v623 = vmul.f32 %v598, %v359
  %v624 = vperm.slane %v619, 0
  %v625 = vmul.f32 %v624, %v620
  %v626 = vmul.f32 %v624, %v621
  %v627 = vmul.f32 %v624, %v622
  %v628 = vmul.f32 %v624, %v623
  %v629 = vadd.f32 %v591, %v625
  %v630 = vadd.f32 %v592, %v626
  %v631 = vadd.f32 %v593, %v627
  %v632 = vadd.f32 %v594, %v628
  %v633 = vld [vmem:[%s0 + $0x8b] sm:$0x1]
  %v634 = vmul.f32 %v595, %v407
  %v635 = vmul.f32 %v596, %v410
  %v636 = vmul.f32 %v597, %v413
  %v637 = vmul.f32 %v598, %v416
  %v638 = vperm.slane %v633, 0
  %v639 = vmul.f32 %v638, %v634
  %v640 = vmul.f32 %v638, %v635
  %v641 = vmul.f32 %v638, %v636
  %v642 = vmul.f32 %v638, %v637
  %v643 = vadd.f32 %v629, %v639
  %v644 = vadd.f32 %v630, %v640
  %v645 = vadd.f32 %v631, %v641
  %v646 = vadd.f32 %v632, %v642
  %v647 = vld [vmem:[%s0 + $0x8c] sm:$0x1]
  %v648 = vmul.f32 %v595, %v464
  %v649 = vmul.f32 %v596, %v467
  %v650 = vmul.f32 %v597, %v470
  %v651 = vmul.f32 %v598, %v473
  %v652 = vperm.slane %v647, 0
  %v653 = vmul.f32 %v652, %v648
  %v654 = vmul.f32 %v652, %v649
  %v655 = vmul.f32 %v652, %v650
  %v656 = vmul.f32 %v652, %v651
  %v657 = vadd.f32 %v643, %v653
  %v658 = vadd.f32 %v644, %v654
  %v659 = vadd.f32 %v645, %v655
  %v660 = vadd.f32 %v646, %v656
  %v661 = vld [vmem:[%s0 + $0x8d] sm:$0x1]
  %v662 = vmul.f32 %v607, %v407
  %v663 = vmul.f32 %v608, %v410
  %v664 = vmul.f32 %v609, %v413
  %v665 = vmul.f32 %v610, %v416
  %v666 = vperm.slane %v661, 0
  %v667 = vmul.f32 %v666, %v662
  %v668 = vmul.f32 %v666, %v663
  %v669 = vmul.f32 %v666, %v664
  %v670 = vmul.f32 %v666, %v665
  %v671 = vadd.f32 %v657, %v667
  %v672 = vadd.f32 %v658, %v668
  %v673 = vadd.f32 %v659, %v669
  %v674 = vadd.f32 %v660, %v670
  %v675 = vld [vmem:[%s0 + $0x8e] sm:$0x1]
  %v676 = vmul.f32 %v607, %v464
  %v677 = vmul.f32 %v608, %v467
  %v678 = vmul.f32 %v609, %v470
  %v679 = vmul.f32 %v610, %v473
  %v680 = vperm.slane %v675, 0
  %v681 = vmul.f32 %v680, %v676
  %v682 = vmul.f32 %v680, %v677
  %v683 = vmul.f32 %v680, %v678
  %v684 = vmul.f32 %v680, %v679
  %v685 = vadd.f32 %v671, %v681
  %v686 = vadd.f32 %v672, %v682
  %v687 = vadd.f32 %v673, %v683
  %v688 = vadd.f32 %v674, %v684
  %v689 = vld [vmem:[%s0 + $0x8f] sm:$0x1]
  %v690 = vmul.f32 %v611, %v464
  %v691 = vmul.f32 %v612, %v467
  %v692 = vmul.f32 %v613, %v470
  %v693 = vmul.f32 %v614, %v473
  %v694 = vperm.slane %v689, 0
  %v695 = vmul.f32 %v694, %v690
  %v696 = vmul.f32 %v694, %v691
  %v697 = vmul.f32 %v694, %v692
  %v698 = vmul.f32 %v694, %v693
  %v699 = vadd.f32 %v685, %v695
  %v700 = vadd.f32 %v686, %v696
  %v701 = vadd.f32 %v687, %v697
  %v702 = vadd.f32 %v688, %v698
  %v703 = vld [vmem:[%s0 + $0x90] sm:$0x1]
  %v704 = vmul.f32 %v599, %v407
  %v705 = vmul.f32 %v600, %v410
  %v706 = vmul.f32 %v601, %v413
  %v707 = vmul.f32 %v602, %v416
  %v708 = vperm.slane %v703, 0
  %v709 = vmul.f32 %v708, %v704
  %v710 = vmul.f32 %v708, %v705
  %v711 = vmul.f32 %v708, %v706
  %v712 = vmul.f32 %v708, %v707
  %v713 = vadd.f32 %v699, %v709
  %v714 = vadd.f32 %v700, %v710
  %v715 = vadd.f32 %v701, %v711
  %v716 = vadd.f32 %v702, %v712
  %v717 = vld [vmem:[%s0 + $0x91] sm:$0x1]
  %v718 = vmul.f32 %v599, %v464
  %v719 = vmul.f32 %v600, %v467
  %v720 = vmul.f32 %v601, %v470
  %v721 = vmul.f32 %v602, %v473
  %v722 = vperm.slane %v717, 0
  %v723 = vmul.f32 %v722, %v718
  %v724 = vmul.f32 %v722, %v719
  %v725 = vmul.f32 %v722, %v720
  %v726 = vmul.f32 %v722, %v721
  %v727 = vadd.f32 %v713, %v723
  %v728 = vadd.f32 %v714, %v724
  %v729 = vadd.f32 %v715, %v725
  %v730 = vadd.f32 %v716, %v726
  %v731 = vld [vmem:[%s0 + $0x92] sm:$0x1]
  %v732 = vmul.f32 %v615, %v464
  %v733 = vmul.f32 %v616, %v467
  %v734 = vmul.f32 %v617, %v470
  %v735 = vmul.f32 %v618, %v473
  %v736 = vperm.slane %v731, 0
  %v737 = vmul.f32 %v736, %v732
  %v738 = vmul.f32 %v736, %v733
  %v739 = vmul.f32 %v736, %v734
  %v740 = vmul.f32 %v736, %v735
  %v741 = vadd.f32 %v727, %v737
  %v742 = vadd.f32 %v728, %v738
  %v743 = vadd.f32 %v729, %v739
  %v744 = vadd.f32 %v730, %v740
  %v745 = vld [vmem:[%s0 + $0x93] sm:$0x1]
  %v746 = vmul.f32 %v603, %v464
  %v747 = vmul.f32 %v604, %v467
  %v748 = vmul.f32 %v605, %v470
  %v749 = vmul.f32 %v606, %v473
  %v750 = vperm.slane %v745, 0
  %v751 = vmul.f32 %v750, %v746
  %v752 = vmul.f32 %v750, %v747
  %v753 = vmul.f32 %v750, %v748
  %v754 = vmul.f32 %v750, %v749
  %v755 = vadd.f32 %v741, %v751
  %v756 = vadd.f32 %v742, %v752
  %v757 = vadd.f32 %v743, %v753
  %v758 = vadd.f32 %v744, %v754
  %v759 = vmul.f32 %v508, %v257
  %v760 = vmul.f32 %v508, %v260
  %v761 = vmul.f32 %v508, %v263
  %v762 = vmul.f32 %v508, %v266
  %v763 = vld [vmem:[%s0 + $0x94] sm:$0x1]
  %v764 = vperm.slane %v763, 0
  %v765 = vmul.f32 %v764, %v326
  %v766 = vmul.f32 %v764, %v329
  %v767 = vmul.f32 %v764, %v332
  %v768 = vmul.f32 %v764, %v335
  %v769 = vadd.f32 %v759, %v765
  %v770 = vadd.f32 %v760, %v766
  %v771 = vadd.f32 %v761, %v767
  %v772 = vadd.f32 %v762, %v768
  %v773 = vld [vmem:[%s0 + $0x95] sm:$0x1]
  %v774 = vperm.slane %v773, 0
  %v775 = vmul.f32 %v774, %v383
  %v776 = vmul.f32 %v774, %v386
  %v777 = vmul.f32 %v774, %v389
  %v778 = vmul.f32 %v774, %v392
  %v779 = vadd.f32 %v769, %v775
  %v780 = vadd.f32 %v770, %v776
  %v781 = vadd.f32 %v771, %v777
  %v782 = vadd.f32 %v772, %v778
  %v783 = vld [vmem:[%s0 + $0x96] sm:$0x1]
  %v784 = vperm.slane %v783, 0
  %v785 = vmul.f32 %v784, %v440
  %v786 = vmul.f32 %v784, %v443
  %v787 = vmul.f32 %v784, %v446
  %v788 = vmul.f32 %v784, %v449
  %v789 = vadd.f32 %v779, %v785
  %v790 = vadd.f32 %v780, %v786
  %v791 = vadd.f32 %v781, %v787
  %v792 = vadd.f32 %v782, %v788
  %v793 = vld [vmem:[%s0 + $0x9d] sm:$0x1]
  %v794 = vperm.slane %v793, 0
  %v795 = vmul.f32 %v794, %v478
  %v796 = vmul.f32 %v794, %v479
  %v797 = vmul.f32 %v794, %v480
  %v798 = vmul.f32 %v794, %v481
  %v799 = vadd.f32 %v789, %v795
  %v800 = vadd.f32 %v790, %v796
  %v801 = vadd.f32 %v791, %v797
  %v802 = vadd.f32 %v792, %v798
  %v803 = vld [vmem:[%s0 + $0x9e] sm:$0x1]
  %v804 = vperm.slane %v803, 0
  %v805 = vmul.f32 %v804, %v482
  %v806 = vmul.f32 %v804, %v483
  %v807 = vmul.f32 %v804, %v484
  %v808 = vmul.f32 %v804, %v485
  %v809 = vadd.f32 %v799, %v805
  %v810 = vadd.f32 %v800, %v806
  %v811 = vadd.f32 %v801, %v807
  %v812 = vadd.f32 %v802, %v808
  %v813 = vld [vmem:[%s0 + $0x9f] sm:$0x1]
  %v814 = vperm.slane %v813, 0
  %v815 = vmul.f32 %v814, %v486
  %v816 = vmul.f32 %v814, %v487
  %v817 = vmul.f32 %v814, %v488
  %v818 = vmul.f32 %v814, %v489
  %v819 = vadd.f32 %v809, %v815
  %v820 = vadd.f32 %v810, %v816
  %v821 = vadd.f32 %v811, %v817
  %v822 = vadd.f32 %v812, %v818
  %v823 = vld [vmem:[%s0 + $0xa0] sm:$0x1]
  %v824 = vperm.slane %v823, 0
  %v825 = vmul.f32 %v824, %v490
  %v826 = vmul.f32 %v824, %v491
  %v827 = vmul.f32 %v824, %v492
  %v828 = vmul.f32 %v824, %v493
  %v829 = vadd.f32 %v819, %v825
  %v830 = vadd.f32 %v820, %v826
  %v831 = vadd.f32 %v821, %v827
  %v832 = vadd.f32 %v822, %v828
  %v833 = vld [vmem:[%s0 + $0xa1] sm:$0x1]
  %v834 = vperm.slane %v833, 0
  %v835 = vmul.f32 %v834, %v494
  %v836 = vmul.f32 %v834, %v495
  %v837 = vmul.f32 %v834, %v496
  %v838 = vmul.f32 %v834, %v497
  %v839 = vadd.f32 %v829, %v835
  %v840 = vadd.f32 %v830, %v836
  %v841 = vadd.f32 %v831, %v837
  %v842 = vadd.f32 %v832, %v838
  %v843 = vld [vmem:[%s0 + $0xa2] sm:$0x1]
  %v844 = vperm.slane %v843, 0
  %v845 = vmul.f32 %v844, %v498
  %v846 = vmul.f32 %v844, %v499
  %v847 = vmul.f32 %v844, %v500
  %v848 = vmul.f32 %v844, %v501
  %v849 = vadd.f32 %v839, %v845
  %v850 = vadd.f32 %v840, %v846
  %v851 = vadd.f32 %v841, %v847
  %v852 = vadd.f32 %v842, %v848
  %v853 = vmul.f32 %v517, %v257
  %v854 = vmul.f32 %v517, %v260
  %v855 = vmul.f32 %v517, %v263
  %v856 = vmul.f32 %v517, %v266
  %v857 = vld [vmem:[%s0 + $0x97] sm:$0x1]
  %v858 = vperm.slane %v857, 0
  %v859 = vmul.f32 %v858, %v326
  %v860 = vmul.f32 %v858, %v329
  %v861 = vmul.f32 %v858, %v332
  %v862 = vmul.f32 %v858, %v335
  %v863 = vadd.f32 %v853, %v859
  %v864 = vadd.f32 %v854, %v860
  %v865 = vadd.f32 %v855, %v861
  %v866 = vadd.f32 %v856, %v862
  %v867 = vld [vmem:[%s0 + $0x98] sm:$0x1]
  %v868 = vperm.slane %v867, 0
  %v869 = vmul.f32 %v868, %v383
  %v870 = vmul.f32 %v868, %v386
  %v871 = vmul.f32 %v868, %v389
  %v872 = vmul.f32 %v868, %v392
  %v873 = vadd.f32 %v863, %v869
  %v874 = vadd.f32 %v864, %v870
  %v875 = vadd.f32 %v865, %v871
  %v876 = vadd.f32 %v866, %v872
  %v877 = vld [vmem:[%s0 + $0x99] sm:$0x1]
  %v878 = vperm.slane %v877, 0
  %v879 = vmul.f32 %v878, %v440
  %v880 = vmul.f32 %v878, %v443
  %v881 = vmul.f32 %v878, %v446
  %v882 = vmul.f32 %v878, %v449
  %v883 = vadd.f32 %v873, %v879
  %v884 = vadd.f32 %v874, %v880
  %v885 = vadd.f32 %v875, %v881
  %v886 = vadd.f32 %v876, %v882
  %v887 = vld [vmem:[%s0 + $0xa3] sm:$0x1]
  %v888 = vperm.slane %v887, 0
  %v889 = vmul.f32 %v888, %v478
  %v890 = vmul.f32 %v888, %v479
  %v891 = vmul.f32 %v888, %v480
  %v892 = vmul.f32 %v888, %v481
  %v893 = vadd.f32 %v883, %v889
  %v894 = vadd.f32 %v884, %v890
  %v895 = vadd.f32 %v885, %v891
  %v896 = vadd.f32 %v886, %v892
  %v897 = vld [vmem:[%s0 + $0xa4] sm:$0x1]
  %v898 = vperm.slane %v897, 0
  %v899 = vmul.f32 %v898, %v482
  %v900 = vmul.f32 %v898, %v483
  %v901 = vmul.f32 %v898, %v484
  %v902 = vmul.f32 %v898, %v485
  %v903 = vadd.f32 %v893, %v899
  %v904 = vadd.f32 %v894, %v900
  %v905 = vadd.f32 %v895, %v901
  %v906 = vadd.f32 %v896, %v902
  %v907 = vld [vmem:[%s0 + $0xa5] sm:$0x1]
  %v908 = vperm.slane %v907, 0
  %v909 = vmul.f32 %v908, %v486
  %v910 = vmul.f32 %v908, %v487
  %v911 = vmul.f32 %v908, %v488
  %v912 = vmul.f32 %v908, %v489
  %v913 = vadd.f32 %v903, %v909
  %v914 = vadd.f32 %v904, %v910
  %v915 = vadd.f32 %v905, %v911
  %v916 = vadd.f32 %v906, %v912
  %v917 = vld [vmem:[%s0 + $0xa6] sm:$0x1]
  %v918 = vperm.slane %v917, 0
  %v919 = vmul.f32 %v918, %v490
  %v920 = vmul.f32 %v918, %v491
  %v921 = vmul.f32 %v918, %v492
  %v922 = vmul.f32 %v918, %v493
  %v923 = vadd.f32 %v913, %v919
  %v924 = vadd.f32 %v914, %v920
  %v925 = vadd.f32 %v915, %v921
  %v926 = vadd.f32 %v916, %v922
  %v927 = vld [vmem:[%s0 + $0xa7] sm:$0x1]
  %v928 = vperm.slane %v927, 0
  %v929 = vmul.f32 %v928, %v494
  %v930 = vmul.f32 %v928, %v495
  %v931 = vmul.f32 %v928, %v496
  %v932 = vmul.f32 %v928, %v497
  %v933 = vadd.f32 %v923, %v929
  %v934 = vadd.f32 %v924, %v930
  %v935 = vadd.f32 %v925, %v931
  %v936 = vadd.f32 %v926, %v932
  %v937 = vld [vmem:[%s0 + $0xa8] sm:$0x1]
  %v938 = vperm.slane %v937, 0
  %v939 = vmul.f32 %v938, %v498
  %v940 = vmul.f32 %v938, %v499
  %v941 = vmul.f32 %v938, %v500
  %v942 = vmul.f32 %v938, %v501
  %v943 = vadd.f32 %v933, %v939
  %v944 = vadd.f32 %v934, %v940
  %v945 = vadd.f32 %v935, %v941
  %v946 = vadd.f32 %v936, %v942
  %v947 = vmul.f32 %v526, %v257
  %v948 = vmul.f32 %v526, %v260
  %v949 = vmul.f32 %v526, %v263
  %v950 = vmul.f32 %v526, %v266
  %v951 = vld [vmem:[%s0 + $0x9a] sm:$0x1]
  %v952 = vperm.slane %v951, 0
  %v953 = vmul.f32 %v952, %v326
  %v954 = vmul.f32 %v952, %v329
  %v955 = vmul.f32 %v952, %v332
  %v956 = vmul.f32 %v952, %v335
  %v957 = vadd.f32 %v947, %v953
  %v958 = vadd.f32 %v948, %v954
  %v959 = vadd.f32 %v949, %v955
  %v960 = vadd.f32 %v950, %v956
  %v961 = vld [vmem:[%s0 + $0x9b] sm:$0x1]
  %v962 = vperm.slane %v961, 0
  %v963 = vmul.f32 %v962, %v383
  %v964 = vmul.f32 %v962, %v386
  %v965 = vmul.f32 %v962, %v389
  %v966 = vmul.f32 %v962, %v392
  %v967 = vadd.f32 %v957, %v963
  %v968 = vadd.f32 %v958, %v964
  %v969 = vadd.f32 %v959, %v965
  %v970 = vadd.f32 %v960, %v966
  %v971 = vld [vmem:[%s0 + $0x9c] sm:$0x1]
  %v972 = vperm.slane %v971, 0
  %v973 = vmul.f32 %v972, %v440
  %v974 = vmul.f32 %v972, %v443
  %v975 = vmul.f32 %v972, %v446
  %v976 = vmul.f32 %v972, %v449
  %v977 = vadd.f32 %v967, %v973
  %v978 = vadd.f32 %v968, %v974
  %v979 = vadd.f32 %v969, %v975
  %v980 = vadd.f32 %v970, %v976
  %v981 = vld [vmem:[%s0 + $0xa9] sm:$0x1]
  %v982 = vperm.slane %v981, 0
  %v983 = vmul.f32 %v982, %v478
  %v984 = vmul.f32 %v982, %v479
  %v985 = vmul.f32 %v982, %v480
  %v986 = vmul.f32 %v982, %v481
  %v987 = vadd.f32 %v977, %v983
  %v988 = vadd.f32 %v978, %v984
  %v989 = vadd.f32 %v979, %v985
  %v990 = vadd.f32 %v980, %v986
  %v991 = vld [vmem:[%s0 + $0xaa] sm:$0x1]
  %v992 = vperm.slane %v991, 0
  %v993 = vmul.f32 %v992, %v482
  %v994 = vmul.f32 %v992, %v483
  %v995 = vmul.f32 %v992, %v484
  %v996 = vmul.f32 %v992, %v485
  %v997 = vadd.f32 %v987, %v993
  %v998 = vadd.f32 %v988, %v994
  %v999 = vadd.f32 %v989, %v995
  %v1000 = vadd.f32 %v990, %v996
  %v1001 = vld [vmem:[%s0 + $0xab] sm:$0x1]
  %v1002 = vperm.slane %v1001, 0
  %v1003 = vmul.f32 %v1002, %v486
  %v1004 = vmul.f32 %v1002, %v487
  %v1005 = vmul.f32 %v1002, %v488
  %v1006 = vmul.f32 %v1002, %v489
  %v1007 = vadd.f32 %v997, %v1003
  %v1008 = vadd.f32 %v998, %v1004
  %v1009 = vadd.f32 %v999, %v1005
  %v1010 = vadd.f32 %v1000, %v1006
  %v1011 = vld [vmem:[%s0 + $0xac] sm:$0x1]
  %v1012 = vperm.slane %v1011, 0
  %v1013 = vmul.f32 %v1012, %v490
  %v1014 = vmul.f32 %v1012, %v491
  %v1015 = vmul.f32 %v1012, %v492
  %v1016 = vmul.f32 %v1012, %v493
  %v1017 = vadd.f32 %v1007, %v1013
  %v1018 = vadd.f32 %v1008, %v1014
  %v1019 = vadd.f32 %v1009, %v1015
  %v1020 = vadd.f32 %v1010, %v1016
  %v1021 = vld [vmem:[%s0 + $0xad] sm:$0x1]
  %v1022 = vperm.slane %v1021, 0
  %v1023 = vmul.f32 %v1022, %v494
  %v1024 = vmul.f32 %v1022, %v495
  %v1025 = vmul.f32 %v1022, %v496
  %v1026 = vmul.f32 %v1022, %v497
  %v1027 = vadd.f32 %v1017, %v1023
  %v1028 = vadd.f32 %v1018, %v1024
  %v1029 = vadd.f32 %v1019, %v1025
  %v1030 = vadd.f32 %v1020, %v1026
  %v1031 = vld [vmem:[%s0 + $0xae] sm:$0x1]
  %v1032 = vperm.slane %v1031, 0
  %v1033 = vmul.f32 %v1032, %v498
  %v1034 = vmul.f32 %v1032, %v499
  %v1035 = vmul.f32 %v1032, %v500
  %v1036 = vmul.f32 %v1032, %v501
  %v1037 = vadd.f32 %v1027, %v1033
  %v1038 = vadd.f32 %v1028, %v1034
  %v1039 = vadd.f32 %v1029, %v1035
  %v1040 = vadd.f32 %v1030, %v1036
  %1042 = vset.pattern.permute.xlu0 0
  %1043 = vperm.xlu0 %1042, %v49
  %v1044 = vpop.permute.xlu0 %1043
  %1047 = vset.pattern.permute.xlu0 0
  %1048 = vperm.xlu0 %1047, %v50
  %v1049 = vpop.permute.xlu0 %1048
  %1052 = vset.pattern.permute.xlu0 0
  %1053 = vperm.xlu0 %1052, %v51
  %v1054 = vpop.permute.xlu0 %1053
  %1057 = vset.pattern.permute.xlu0 0
  %1058 = vperm.xlu0 %1057, %v52
  %v1059 = vpop.permute.xlu0 %1058
  %v1062 = vsel %vm85, %v37, 0
  %v1065 = vsel %vm85, %v38, 0
  %v1068 = vsel %vm85, %v39, 0
  %v1071 = vsel %vm85, %v40, 0
  %1073 = vmatpush.msra.mxu0 0.0
  %1074 = vmatpush.msra.mxu0 0.0
  %1075 = vmatpush.msra.mxu0 0.0
  %1076 = vmatpush.msra.mxu0 0.0
  %1077 = vmatpush.msra.mxu0 0.0
  %1078 = vmatpush.msra.mxu0 0.0
  %1079 = vmatpush.msra.mxu0 0.0
  %1080 = vmatpush.msra.mxu0 0.0
  %1081 = vmatpush.msra.mxu0 0.0
  %1082 = vmatpush.msra.mxu0 0.0
  %1083 = vmatpush.msra.mxu0 0.0
  %1084 = vmatpush.msra.mxu0 0.0
  %1085 = vmatpush.msra.mxu0 %v758
  %1086 = vmatpush.msra.mxu0 %v757
  %1087 = vmatpush.msra.mxu0 %v756
  %1088 = vmatpush.msra.mxu0 %v755
  %1089 = vmatmul.f32.gmra.mxu0 %v1062
  %v1090 = vpop.f32.mrf.mxu0
  %v1091 = vadd.f32 %v1044, %v1090
  %1092 = vmatmul.f32.gmra.mxu0 %v1065
  %v1093 = vpop.f32.mrf.mxu0
  %v1094 = vadd.f32 %v1049, %v1093
  %1095 = vmatmul.f32.gmra.mxu0 %v1068
  %v1096 = vpop.f32.mrf.mxu0
  %v1097 = vadd.f32 %v1054, %v1096
  %1098 = vmatmul.f32.gmra.mxu0 %v1071
  %v1099 = vpop.f32.mrf.mxu0
  %v1100 = vadd.f32 %v1059, %v1099
  %1101 = vdwg.mxu0
  %v1102 = vsub.f32 0.0, %v1091
  %v1103 = vsub.f32 0.0, %v1094
  %v1104 = vsub.f32 0.0, %v1097
  %v1105 = vsub.f32 0.0, %v1100
  %v1106 = vmul.f32 %v1102, 1.442695
  %v1107 = vpow.pop %v1106
  %v1108 = vmul.f32 %v1103, 1.442695
  %v1109 = vpow.pop %v1108
  %v1110 = vmul.f32 %v1104, 1.442695
  %v1111 = vpow.pop %v1110
  %v1112 = vmul.f32 %v1105, 1.442695
  %v1113 = vpow.pop %v1112
  %v1114 = vadd.f32 %v1107, 1.0
  %v1115 = vadd.f32 %v1109, 1.0
  %v1116 = vadd.f32 %v1111, 1.0
  %v1117 = vadd.f32 %v1113, 1.0
  %v1118 = vrcp.pop %v1114
  %v1119 = vmul.f32 %v1114, %v1118
  %v1120 = vsub.f32 1.0, %v1119
  %v1121 = vmul.f32 %v1118, %v1120
  %v1122 = vadd.f32 %v1118, %v1121
  %vm1123 = vweird.f32 %v1114
  %vm1124 = vweird.f32 %v1118
  %vm1125 = vmor %vm1123, %vm1124
  %v1126 = vsel %vm1125, %v1118, %v1122
  %v1127 = vand.u32 2147483647, %v1114
  %vm1128 = vcmp.eq.f32.partialorder %v1127, 8.507059e+37
  %v1129 = vand.u32 %v1114, 2147483648
  %v1130 = vor.u32 1.1754944e-38, %v1129
  %v1131 = vsel %vm1128, %v1130, %v1126
  %v1132 = vmul.f32 1.0, %v1131
  %v1133 = vrcp.pop %v1115
  %v1134 = vmul.f32 %v1115, %v1133
  %v1135 = vsub.f32 1.0, %v1134
  %v1136 = vmul.f32 %v1133, %v1135
  %v1137 = vadd.f32 %v1133, %v1136
  %vm1138 = vweird.f32 %v1115
  %vm1139 = vweird.f32 %v1133
  %vm1140 = vmor %vm1138, %vm1139
  %v1141 = vsel %vm1140, %v1133, %v1137
  %v1142 = vand.u32 2147483647, %v1115
  %vm1143 = vcmp.eq.f32.partialorder %v1142, 8.507059e+37
  %v1144 = vand.u32 %v1115, 2147483648
  %v1145 = vor.u32 1.1754944e-38, %v1144
  %v1146 = vsel %vm1143, %v1145, %v1141
  %v1147 = vmul.f32 1.0, %v1146
  %v1148 = vrcp.pop %v1116
  %v1149 = vmul.f32 %v1116, %v1148
  %v1150 = vsub.f32 1.0, %v1149
  %v1151 = vmul.f32 %v1148, %v1150
  %v1152 = vadd.f32 %v1148, %v1151
  %vm1153 = vweird.f32 %v1116
  %vm1154 = vweird.f32 %v1148
  %vm1155 = vmor %vm1153, %vm1154
  %v1156 = vsel %vm1155, %v1148, %v1152
  %v1157 = vand.u32 2147483647, %v1116
  %vm1158 = vcmp.eq.f32.partialorder %v1157, 8.507059e+37
  %v1159 = vand.u32 %v1116, 2147483648
  %v1160 = vor.u32 1.1754944e-38, %v1159
  %v1161 = vsel %vm1158, %v1160, %v1156
  %v1162 = vmul.f32 1.0, %v1161
  %v1163 = vrcp.pop %v1117
  %v1164 = vmul.f32 %v1117, %v1163
  %v1165 = vsub.f32 1.0, %v1164
  %v1166 = vmul.f32 %v1163, %v1165
  %v1167 = vadd.f32 %v1163, %v1166
  %vm1168 = vweird.f32 %v1117
  %vm1169 = vweird.f32 %v1163
  %vm1170 = vmor %vm1168, %vm1169
  %v1171 = vsel %vm1170, %v1163, %v1167
  %v1172 = vand.u32 2147483647, %v1117
  %vm1173 = vcmp.eq.f32.partialorder %v1172, 8.507059e+37
  %v1174 = vand.u32 %v1117, 2147483648
  %v1175 = vor.u32 1.1754944e-38, %v1174
  %v1176 = vsel %vm1173, %v1175, %v1171
  %v1177 = vmul.f32 1.0, %v1176
  %v1178 = vmul.f32 %v1091, %v1132
  %v1179 = vmul.f32 %v1094, %v1147
  %v1180 = vmul.f32 %v1097, %v1162
  %v1181 = vmul.f32 %v1100, %v1177
  %v1182 = vld [vmem:[%s2] sm:$0xff]
  %v1183 = vld [vmem:[%s2 + $0x8] sm:$0xff]
  %v1184 = vld [vmem:[%s2 + $0x10] sm:$0xff]
  %v1185 = vld [vmem:[%s2 + $0x18] sm:$0xff]
  %v1186 = vld [vmem:[%s2 + $0x20] sm:$0xff]
  %v1187 = vld [vmem:[%s2 + $0x28] sm:$0xff]
  %v1188 = vld [vmem:[%s2 + $0x30] sm:$0xff]
  %v1189 = vld [vmem:[%s2 + $0x38] sm:$0xff]
  %1191 = vset.pattern.permute.xlu0 0
  %1192 = vperm.xlu0 %1191, %v53
  %v1193 = vpop.permute.xlu0 %1192
  %1196 = vset.pattern.permute.xlu0 0
  %1197 = vperm.xlu0 %1196, %v54
  %v1198 = vpop.permute.xlu0 %1197
  %1201 = vset.pattern.permute.xlu0 0
  %1202 = vperm.xlu0 %1201, %v55
  %v1203 = vpop.permute.xlu0 %1202
  %1206 = vset.pattern.permute.xlu0 0
  %1207 = vperm.xlu0 %1206, %v56
  %v1208 = vpop.permute.xlu0 %1207
  %1211 = vset.pattern.permute.xlu0 0
  %1212 = vperm.xlu0 %1211, %v57
  %v1213 = vpop.permute.xlu0 %1212
  %1216 = vset.pattern.permute.xlu0 0
  %1217 = vperm.xlu0 %1216, %v58
  %v1218 = vpop.permute.xlu0 %1217
  %1221 = vset.pattern.permute.xlu0 0
  %1222 = vperm.xlu0 %1221, %v59
  %v1223 = vpop.permute.xlu0 %1222
  %1226 = vset.pattern.permute.xlu0 0
  %1227 = vperm.xlu0 %1226, %v60
  %v1228 = vpop.permute.xlu0 %1227
  %1230 = vmatpush.msra.mxu0 %v1040
  %1231 = vmatpush.msra.mxu0 %v1039
  %1232 = vmatpush.msra.mxu0 %v1038
  %1233 = vmatpush.msra.mxu0 %v1037
  %1234 = vmatpush.msra.mxu0 %v946
  %1235 = vmatpush.msra.mxu0 %v945
  %1236 = vmatpush.msra.mxu0 %v944
  %1237 = vmatpush.msra.mxu0 %v943
  %1238 = vmatpush.msra.mxu0 %v852
  %1239 = vmatpush.msra.mxu0 %v851
  %1240 = vmatpush.msra.mxu0 %v850
  %1241 = vmatpush.msra.mxu0 %v849
  %1242 = vmatpush.msra.mxu0 %v1181
  %1243 = vmatpush.msra.mxu0 %v1180
  %1244 = vmatpush.msra.mxu0 %v1179
  %1245 = vmatpush.msra.mxu0 %v1178
  %1246 = vmatmul.f32.gmra.mxu0 %v1182
  %v1247 = vpop.f32.mrf.mxu0
  %v1248 = vadd.f32 %v1193, %v1247
  %1249 = vmatmul.f32.gmra.mxu0 %v1183
  %v1250 = vpop.f32.mrf.mxu0
  %v1251 = vadd.f32 %v1198, %v1250
  %1252 = vmatmul.f32.gmra.mxu0 %v1184
  %v1253 = vpop.f32.mrf.mxu0
  %v1254 = vadd.f32 %v1203, %v1253
  %1255 = vmatmul.f32.gmra.mxu0 %v1185
  %v1256 = vpop.f32.mrf.mxu0
  %v1257 = vadd.f32 %v1208, %v1256
  %1258 = vmatmul.f32.gmra.mxu0 %v1186
  %v1259 = vpop.f32.mrf.mxu0
  %v1260 = vadd.f32 %v1213, %v1259
  %1261 = vmatmul.f32.gmra.mxu0 %v1187
  %v1262 = vpop.f32.mrf.mxu0
  %v1263 = vadd.f32 %v1218, %v1262
  %1264 = vmatmul.f32.gmra.mxu0 %v1188
  %v1265 = vpop.f32.mrf.mxu0
  %v1266 = vadd.f32 %v1223, %v1265
  %1267 = vmatmul.f32.gmra.mxu0 %v1189
  %v1268 = vpop.f32.mrf.mxu0
  %v1269 = vadd.f32 %v1228, %v1268
  %1270 = vdwg.mxu0
  %1271 = vst [vmem:[%s4] sm:$0xff] %v1248
  %1272 = vst [vmem:[%s4 + $0x8] sm:$0xff] %v1251
  %1273 = vst [vmem:[%s4 + $0x10] sm:$0xff] %v1254
  %1274 = vst [vmem:[%s4 + $0x18] sm:$0xff] %v1257
  %1275 = vst [vmem:[%s4 + $0x20] sm:$0xff] %v1260
  %1276 = vst [vmem:[%s4 + $0x28] sm:$0xff] %v1263
  %1277 = vst [vmem:[%s4 + $0x30] sm:$0xff] %v1266
  %1278 = vst [vmem:[%s4 + $0x38] sm:$0xff] %v1269
  // Predicated region
  $region18: #{multipole_interaction_pallas.1} parent=0 // pred_check
    _
  $region19: #{multipole_interaction_pallas.1} parent=0 // pred_check_branch
    %1280 = sbr.rel (0) target = $region21
  $region20: #{multipole_interaction_pallas.1} parent=0 // pred_region
    _
  $region21: #{multipole_interaction_pallas.1} parent=0 // pred_fallthru
    _
  // Predicated region
  $region22: #{multipole_interaction_pallas.1} parent=0 // pred_check
    _
  $region23: #{multipole_interaction_pallas.1} parent=0 // pred_check_branch
    %1282 = sbr.rel (0) target = $region25
  $region24: #{multipole_interaction_pallas.1} parent=0 // pred_region
    _
  $region25: #{multipole_interaction_pallas.1} parent=0 // pred_fallthru
    _

</llo_original>
